<compile_context>
chip_gen: v5e
topology: v5e:2x2
jax: 0.10.0
libtpu: 0.0.40
codegen_flags: <defaults>
</compile_context>

<pallas_src>
import functools

import jax
import jax.numpy as jnp
from jax.experimental import pallas as pl
from jax.experimental.pallas import tpu as pltpu

# Small, self-consistent sizes (the PyTorch file hardcodes embeddings_count=384;
# scaled down but with identical forward semantics).
EMBD = 128            # num_embd / embeddings_count
NUM_HEADS = 4
HEAD_SIZE = EMBD // NUM_HEADS
HIDDEN = 4 * EMBD
BATCH = 2
SEQ = 16              # T (<= token_size, causal mask tril[:T,:T])
EPS = 1e-5            # nn.LayerNorm default
NEG_BIG = -1e30       # finite "masked" value (safer than -inf)


def _layernorm(v, gamma, beta):
    mu = jnp.mean(v, axis=-1, keepdims=True)
    var = jnp.mean((v - mu) ** 2, axis=-1, keepdims=True)
    return (v - mu) * jax.lax.rsqrt(var + EPS) * gamma + beta


def block_kernel(x_ref, wqkv_ref, wp_ref, w1_ref, b1_ref, w2_ref, vecs_ref,
                 o_ref, *, B, T):
    C = x_ref.shape[-1]
    D = C // NUM_HEADS
    BT = B * T

    x = x_ref[...]                                     # (B*T, C) f32

    # Packed (6, C) vector slab: [gamma1, beta1, proj_bias, gamma2, beta2, b2]
    g1 = vecs_ref[0:1, :]
    be1 = vecs_ref[1:2, :]
    bp = vecs_ref[2:3, :]
    g2 = vecs_ref[3:4, :]
    be2 = vecs_ref[4:5, :]
    b2 = vecs_ref[5:6, :]

    # ---- ln1 + fused QKV projection (bf16 MXU, f32 accumulate) ----
    ln1 = _layernorm(x, g1, be1)
    qkv = jnp.dot(ln1.astype(jnp.bfloat16), wqkv_ref[...],
                  preferred_element_type=jnp.float32)   # (B*T, 3C) f32
    qkv = qkv.astype(jnp.bfloat16)                      # cast ONCE for the MXU
    q = qkv[:, :C]
    k = qkv[:, C:2 * C]
    v = qkv[:, 2 * C:]

    # Block-diagonal causal mask over the flattened (B*T, B*T) score matrix:
    # allowed(r, c)  <=>  batch(r) == batch(c)  and  c <= r
    # expressed as  row_start(r) <= c <= r   with  row_start(r) = batch(r)*T.
    rows = jax.lax.broadcasted_iota(jnp.int32, (BT, BT), 0)
    cols = jax.lax.broadcasted_iota(jnp.int32, (BT, BT), 1)
    if (T & (T - 1)) == 0:
        # T is a power of two: row_start via a bitwise AND (cheap, no int div).
        row_start = rows & (-T)
    else:
        # General case: leading-dim iota gives batch(r), then * T.
        row_start = (jax.lax.broadcasted_iota(jnp.int32, (B, T, BT), 0)
                     ).reshape(BT, BT) * T
    mask = (cols <= rows) & (cols >= row_start)

    scale = D ** -0.5

    # ---- per-head causal attention on the full (B*T, D) slab ----
    head_outs = []
    for h in range(NUM_HEADS):
        sl = slice(h * D, (h + 1) * D)
        qh = q[:, sl]                                   # (B*T, D) bf16
        kh = k[:, sl]
        vh = v[:, sl]
        # contract kh's last dim directly — no explicit transpose
        s = jax.lax.dot_general(
            qh, kh, (((1,), (1,)), ((), ())),
            preferred_element_type=jnp.float32) * scale  # (B*T, B*T) f32
        s = jnp.where(mask, s, NEG_BIG)
        m = jnp.max(s, axis=-1, keepdims=True)
        p = jnp.exp(s - m)
        p = p * pl.reciprocal(jnp.sum(p, axis=-1, keepdims=True), approx=True)
        ho = jnp.dot(p.astype(jnp.bfloat16), vh,
                     preferred_element_type=jnp.float32)  # (B*T, D) f32
        head_outs.append(ho)

    # Single K=C output projection on the lane-concatenated head outputs.
    ho_all = jnp.concatenate(head_outs, axis=-1)        # (B*T, C) f32
    attn = jnp.dot(ho_all.astype(jnp.bfloat16), wp_ref[...],
                   preferred_element_type=jnp.float32) + bp

    x1 = x + attn                                       # residual 1

    # ---- ln2 + feed-forward (bf16 MXU, f32 accumulate) ----
    ln2 = _layernorm(x1, g2, be2)
    h1 = jnp.maximum(
        jnp.dot(ln2.astype(jnp.bfloat16), w1_ref[...],
                preferred_element_type=jnp.float32) + b1_ref[...], 0.0)
    ffn = jnp.dot(h1.astype(jnp.bfloat16), w2_ref[...],
                  preferred_element_type=jnp.float32) + b2

    o_ref[...] = (x1 + ffn).astype(o_ref.dtype)         # residual 2


def pack_params(params):
    """One-time packing: fused bf16 QKV weight, bf16 matmul weights, and a
    stacked (6, C) slab for the small per-channel vectors."""
    (wq, wk, wv, wp, bp, w1, b1, w2, b2, g1, be1, g2, be2) = params
    wqkv = jnp.concatenate([wq, wk, wv], axis=1).astype(jnp.bfloat16)  # (C, 3C)
    vecs = jnp.concatenate([g1, be1, bp, g2, be2, b2], axis=0)         # (6, C)
    return (wqkv,
            wp.astype(jnp.bfloat16),
            w1.astype(jnp.bfloat16),
            b1,
            w2.astype(jnp.bfloat16),
            vecs)


def block_forward(x, packed):
    B, T, C = x.shape
    BT = B * T
    wqkv, wp_b, w1_b, b1, w2_b, vecs = packed

    # Lane-dense 2-D activation slab in/out of the kernel.
    x2d = x.reshape(BT, C)

    full = lambda shp: pl.BlockSpec(shp, lambda i: (0, 0))
    in_specs = [
        full((BT, C)),            # x (flattened batch*seq)
        full((C, 3 * C)),         # wqkv (bf16)
        full((C, C)),             # wp   (bf16)
        full((C, HIDDEN)),        # w1   (bf16)
        full((1, HIDDEN)),        # b1
        full((HIDDEN, C)),        # w2   (bf16)
        full((6, C)),             # [g1, be1, bp, g2, be2, b2]
    ]

    out2d = pl.pallas_call(
        functools.partial(block_kernel, B=B, T=T),
        out_shape=jax.ShapeDtypeStruct((BT, C), x.dtype),
        grid_spec=pltpu.PrefetchScalarGridSpec(
            num_scalar_prefetch=0,
            grid=(1,),                       # single invocation — no per-step overhead
            in_specs=in_specs,
            out_specs=full((BT, C)),
        ),
        compiler_params=pltpu.CompilerParams(
            dimension_semantics=("arbitrary",)),
    )(x2d, wqkv, wp_b, w1_b, b1, w2_b, vecs)

    return out2d.reshape(B, T, C)


def block_reference(x, params):
    (wq, wk, wv, wp, bp, w1, b1, w2, b2, g1, be1, g2, be2) = params
    ln1 = _layernorm(x, g1, be1)
    q = ln1 @ wq
    k = ln1 @ wk
    v = ln1 @ wv
    B, T, C = x.shape
    qh = q.reshape(B, T, NUM_HEADS, HEAD_SIZE).transpose(0, 2, 1, 3)
    kh = k.reshape(B, T, NUM_HEADS, HEAD_SIZE).transpose(0, 2, 1, 3)
    vh = v.reshape(B, T, NUM_HEADS, HEAD_SIZE).transpose(0, 2, 1, 3)
    s = jnp.einsum("bhqd,bhkd->bhqk", qh, kh) * HEAD_SIZE ** -0.5
    mask = jnp.tril(jnp.ones((T, T), bool))
    s = jnp.where(mask, s, -jnp.inf)
    p = jax.nn.softmax(s, axis=-1)
    o = jnp.einsum("bhqk,bhkd->bhqd", p, vh).transpose(0, 2, 1, 3).reshape(B, T, C)
    x1 = x + (o @ wp + bp)
    ln2 = _layernorm(x1, g2, be2)
    ffn = jnp.maximum(ln2 @ w1 + b1, 0.0) @ w2 + b2
    return x1 + ffn


def init_params(key):
    C, H = EMBD, HIDDEN
    ks = jax.random.split(key, 8)
    scale = 0.02
    wq = scale * jax.random.normal(ks[0], (C, C), jnp.float32)
    wk = scale * jax.random.normal(ks[1], (C, C), jnp.float32)
    wv = scale * jax.random.normal(ks[2], (C, C), jnp.float32)
    wp = scale * jax.random.normal(ks[3], (C, C), jnp.float32)
    bp = scale * jax.random.normal(ks[4], (1, C), jnp.float32)
    w1 = scale * jax.random.normal(ks[5], (C, H), jnp.float32)
    b1 = scale * jax.random.normal(ks[6], (1, H), jnp.float32)
    w2 = scale * jax.random.normal(ks[7], (H, C), jnp.float32)
    b2 = jnp.zeros((1, C), jnp.float32)
    g1 = jnp.ones((1, C), jnp.float32)    # LayerNorm defaults
    be1 = jnp.zeros((1, C), jnp.float32)
    g2 = jnp.ones((1, C), jnp.float32)
    be2 = jnp.zeros((1, C), jnp.float32)
    return (wq, wk, wv, wp, bp, w1, b1, w2, b2, g1, be1, g2, be2)


if __name__ == "__main__":
    key = jax.random.PRNGKey(0)
    kx, kp = jax.random.split(key)
    x = jax.random.normal(kx, (BATCH, SEQ, EMBD), jnp.float32)
    params = init_params(kp)

    # One-time weight packing (would live next to parameter init in a model).
    packed = jax.block_until_ready(pack_params(params))

    out = jax.block_until_ready(block_forward(x, packed))

    ref = block_reference(x, params)
    assert out.shape == (BATCH, SEQ, EMBD)
    # bf16 MXU inputs + approx-reciprocal softmax vs. a pure-f32 reference:
    # tolerance is loosened accordingly (errors observed are ~1e-3).
    max_err = jnp.max(jnp.abs(out - ref))
    assert jnp.allclose(out, ref, atol=2e-2, rtol=2e-2), (
        f"mismatch vs reference (max abs err {max_err})")
    print("KERNEL_OK")
</pallas_src>

<mosaic_0001>
module attributes {stable_mosaic.version = 11 : i64} {
  func.func @block_kernel(%arg0: i32, %arg1: memref<32x128xf32, #tpu.memory_space<vmem>>, %arg2: memref<128x384xbf16, #tpu.memory_space<vmem>>, %arg3: memref<128x128xbf16, #tpu.memory_space<vmem>>, %arg4: memref<128x512xbf16, #tpu.memory_space<vmem>>, %arg5: memref<1x512xf32, #tpu.memory_space<vmem>>, %arg6: memref<512x128xbf16, #tpu.memory_space<vmem>>, %arg7: memref<6x128xf32, #tpu.memory_space<vmem>>, %arg8: memref<32x128xf32, #tpu.memory_space<vmem>>) attributes {dimension_semantics = [#tpu.dimension_semantics<arbitrary>], iteration_bounds = array<i64: 1>, scalar_prefetch = 0 : i64, scratch_operands = 0 : i64, tpu.core_type = #tpu.core_type<tc>, window_params = [{pipeline_mode = #tpu.pipeline_mode<synchronous>, transform_indices = @transform_0, window_bounds = array<i64: 32, 128>}, {pipeline_mode = #tpu.pipeline_mode<synchronous>, transform_indices = @transform_1, window_bounds = array<i64: 128, 384>}, {pipeline_mode = #tpu.pipeline_mode<synchronous>, transform_indices = @transform_2, window_bounds = array<i64: 128, 128>}, {pipeline_mode = #tpu.pipeline_mode<synchronous>, transform_indices = @transform_3, window_bounds = array<i64: 128, 512>}, {pipeline_mode = #tpu.pipeline_mode<synchronous>, transform_indices = @transform_4, window_bounds = array<i64: 1, 512>}, {pipeline_mode = #tpu.pipeline_mode<synchronous>, transform_indices = @transform_5, window_bounds = array<i64: 512, 128>}, {pipeline_mode = #tpu.pipeline_mode<synchronous>, transform_indices = @transform_6, window_bounds = array<i64: 6, 128>}, {pipeline_mode = #tpu.pipeline_mode<synchronous>, transform_indices = @transform_7, window_bounds = array<i64: 32, 128>}]} {
    %c0 = arith.constant 0 : index
    %c0_0 = arith.constant 0 : index
    %0 = vector.load %arg1[%c0, %c0_0] : memref<32x128xf32, #tpu.memory_space<vmem>>, vector<32x128xf32>
    %c0_1 = arith.constant 0 : index
    %c0_2 = arith.constant 0 : index
    %1 = vector.load %arg7[%c0_1, %c0_2] : memref<6x128xf32, #tpu.memory_space<vmem>>, vector<1x128xf32>
    %c1 = arith.constant 1 : index
    %c0_3 = arith.constant 0 : index
    %2 = vector.load %arg7[%c1, %c0_3] : memref<6x128xf32, #tpu.memory_space<vmem>>, vector<1x128xf32>
    %c2 = arith.constant 2 : index
    %c0_4 = arith.constant 0 : index
    %3 = vector.load %arg7[%c2, %c0_4] : memref<6x128xf32, #tpu.memory_space<vmem>>, vector<1x128xf32>
    %c3 = arith.constant 3 : index
    %c0_5 = arith.constant 0 : index
    %4 = vector.load %arg7[%c3, %c0_5] : memref<6x128xf32, #tpu.memory_space<vmem>>, vector<1x128xf32>
    %c4 = arith.constant 4 : index
    %c0_6 = arith.constant 0 : index
    %5 = vector.load %arg7[%c4, %c0_6] : memref<6x128xf32, #tpu.memory_space<vmem>>, vector<1x128xf32>
    %c5 = arith.constant 5 : index
    %c0_7 = arith.constant 0 : index
    %6 = vector.load %arg7[%c5, %c0_7] : memref<6x128xf32, #tpu.memory_space<vmem>>, vector<1x128xf32>
    %cst = arith.constant dense<0.000000e+00> : vector<32xf32>
    %7 = vector.multi_reduction <add>, %0, %cst [1] : vector<32x128xf32> to vector<32xf32>
    %8 = vector.shape_cast %7 : vector<32xf32> to vector<32x1xf32>
    %cst_8 = arith.constant 1.280000e+02 : f32
    %9 = vector.broadcast %cst_8 : f32 to vector<32x1xf32>
    %10 = arith.divf %8, %9 : vector<32x1xf32>
    %11 = vector.broadcast %10 : vector<32x1xf32> to vector<32x128xf32>
    %12 = arith.subf %0, %11 : vector<32x128xf32>
    %13 = arith.mulf %12, %12 : vector<32x128xf32>
    %cst_9 = arith.constant dense<0.000000e+00> : vector<32xf32>
    %14 = vector.multi_reduction <add>, %13, %cst_9 [1] : vector<32x128xf32> to vector<32xf32>
    %15 = vector.shape_cast %14 : vector<32xf32> to vector<32x1xf32>
    %cst_10 = arith.constant 1.280000e+02 : f32
    %16 = vector.broadcast %cst_10 : f32 to vector<32x1xf32>
    %17 = arith.divf %15, %16 : vector<32x1xf32>
    %18 = vector.broadcast %10 : vector<32x1xf32> to vector<32x128xf32>
    %19 = arith.subf %0, %18 : vector<32x128xf32>
    %cst_11 = arith.constant 9.99999974E-6 : f32
    %20 = vector.broadcast %cst_11 : f32 to vector<32x1xf32>
    %21 = arith.addf %17, %20 : vector<32x1xf32>
    %22 = math.rsqrt %21 : vector<32x1xf32>
    %23 = vector.broadcast %22 : vector<32x1xf32> to vector<32x128xf32>
    %24 = arith.mulf %19, %23 : vector<32x128xf32>
    %25 = vector.broadcast %1 : vector<1x128xf32> to vector<32x128xf32>
    %26 = arith.mulf %24, %25 : vector<32x128xf32>
    %27 = vector.broadcast %2 : vector<1x128xf32> to vector<32x128xf32>
    %28 = arith.addf %26, %27 : vector<32x128xf32>
    %29 = arith.truncf %28 : vector<32x128xf32> to vector<32x128xbf16>
    %c0_12 = arith.constant 0 : index
    %c0_13 = arith.constant 0 : index
    %30 = vector.load %arg2[%c0_12, %c0_13] : memref<128x384xbf16, #tpu.memory_space<vmem>>, vector<128x384xbf16>
    %cst_14 = arith.constant dense<0.000000e+00> : vector<32x384xf32>
    %31 = tpu.matmul %29, %30, %cst_14 {dimension_numbers = #tpu.dot_dimension_numbers<[1], [0], [0], [1], [0, 0, 1, 1], [], []>} : vector<32x128xbf16>, vector<128x384xbf16>, vector<32x384xf32> -> vector<32x384xf32>
    %32 = arith.truncf %31 : vector<32x384xf32> to vector<32x384xbf16>
    %33 = vector.extract_strided_slice %32 {offsets = [0, 0], sizes = [32, 128], strides = [1, 1]} : vector<32x384xbf16> to vector<32x128xbf16>
    %34 = vector.extract_strided_slice %32 {offsets = [0, 128], sizes = [32, 128], strides = [1, 1]} : vector<32x384xbf16> to vector<32x128xbf16>
    %35 = vector.extract_strided_slice %32 {offsets = [0, 256], sizes = [32, 128], strides = [1, 1]} : vector<32x384xbf16> to vector<32x128xbf16>
    %36 = tpu.iota {dimensions = array<i32: 0>} : vector<32x32xi32>
    %37 = tpu.iota {dimensions = array<i32: 1>} : vector<32x32xi32>
    %c-16_i32 = arith.constant -16 : i32
    %38 = vector.broadcast %c-16_i32 : i32 to vector<32x32xi32>
    %39 = arith.andi %36, %38 : vector<32x32xi32>
    %40 = arith.cmpi sle, %37, %36 : vector<32x32xi32>
    %41 = arith.cmpi sge, %37, %39 : vector<32x32xi32>
    %42 = arith.andi %40, %41 : vector<32x32xi1>
    %43 = vector.extract_strided_slice %33 {offsets = [0, 0], sizes = [32, 32], strides = [1, 1]} : vector<32x128xbf16> to vector<32x32xbf16>
    %44 = vector.extract_strided_slice %34 {offsets = [0, 0], sizes = [32, 32], strides = [1, 1]} : vector<32x128xbf16> to vector<32x32xbf16>
    %45 = vector.extract_strided_slice %35 {offsets = [0, 0], sizes = [32, 32], strides = [1, 1]} : vector<32x128xbf16> to vector<32x32xbf16>
    %cst_15 = arith.constant dense<0.000000e+00> : vector<32x32xf32>
    %46 = tpu.matmul %43, %44, %cst_15 {dimension_numbers = #tpu.dot_dimension_numbers<[1], [1], [0], [0], [0, 0, 1, 0], [], []>} : vector<32x32xbf16>, vector<32x32xbf16>, vector<32x32xf32> -> vector<32x32xf32>
    %cst_16 = arith.constant 0.176776692 : f32
    %47 = vector.broadcast %cst_16 : f32 to vector<32x32xf32>
    %48 = arith.mulf %46, %47 : vector<32x32xf32>
    %cst_17 = arith.constant -1.000000e+30 : f32
    %49 = vector.broadcast %cst_17 : f32 to vector<32x32xf32>
    %50 = arith.select %42, %48, %49 : vector<32x32xi1>, vector<32x32xf32>
    %cst_18 = arith.constant dense<0xFF800000> : vector<32xf32>
    %51 = vector.multi_reduction <maximumf>, %50, %cst_18 [1] : vector<32x32xf32> to vector<32xf32>
    %52 = vector.shape_cast %51 : vector<32xf32> to vector<32x1xf32>
    %53 = vector.broadcast %52 : vector<32x1xf32> to vector<32x32xf32>
    %54 = arith.subf %50, %53 : vector<32x32xf32>
    %55 = math.exp %54 : vector<32x32xf32>
    %cst_19 = arith.constant dense<0.000000e+00> : vector<32xf32>
    %56 = vector.multi_reduction <add>, %55, %cst_19 [1] : vector<32x32xf32> to vector<32xf32>
    %57 = vector.shape_cast %56 : vector<32xf32> to vector<32x1xf32>
    %58 = tpu.reciprocal %57 {approx = true} : vector<32x1xf32> -> vector<32x1xf32>
    %59 = vector.broadcast %58 : vector<32x1xf32> to vector<32x32xf32>
    %60 = arith.mulf %55, %59 : vector<32x32xf32>
    %61 = arith.truncf %60 : vector<32x32xf32> to vector<32x32xbf16>
    %cst_20 = arith.constant dense<0.000000e+00> : vector<32x32xf32>
    %62 = tpu.matmul %61, %45, %cst_20 {dimension_numbers = #tpu.dot_dimension_numbers<[1], [0], [0], [1], [0, 0, 1, 1], [], []>} : vector<32x32xbf16>, vector<32x32xbf16>, vector<32x32xf32> -> vector<32x32xf32>
    %63 = vector.extract_strided_slice %33 {offsets = [0, 32], sizes = [32, 32], strides = [1, 1]} : vector<32x128xbf16> to vector<32x32xbf16>
    %64 = vector.extract_strided_slice %34 {offsets = [0, 32], sizes = [32, 32], strides = [1, 1]} : vector<32x128xbf16> to vector<32x32xbf16>
    %65 = vector.extract_strided_slice %35 {offsets = [0, 32], sizes = [32, 32], strides = [1, 1]} : vector<32x128xbf16> to vector<32x32xbf16>
    %cst_21 = arith.constant dense<0.000000e+00> : vector<32x32xf32>
    %66 = tpu.matmul %63, %64, %cst_21 {dimension_numbers = #tpu.dot_dimension_numbers<[1], [1], [0], [0], [0, 0, 1, 0], [], []>} : vector<32x32xbf16>, vector<32x32xbf16>, vector<32x32xf32> -> vector<32x32xf32>
    %cst_22 = arith.constant 0.176776692 : f32
    %67 = vector.broadcast %cst_22 : f32 to vector<32x32xf32>
    %68 = arith.mulf %66, %67 : vector<32x32xf32>
    %cst_23 = arith.constant -1.000000e+30 : f32
    %69 = vector.broadcast %cst_23 : f32 to vector<32x32xf32>
    %70 = arith.select %42, %68, %69 : vector<32x32xi1>, vector<32x32xf32>
    %cst_24 = arith.constant dense<0xFF800000> : vector<32xf32>
    %71 = vector.multi_reduction <maximumf>, %70, %cst_24 [1] : vector<32x32xf32> to vector<32xf32>
    %72 = vector.shape_cast %71 : vector<32xf32> to vector<32x1xf32>
    %73 = vector.broadcast %72 : vector<32x1xf32> to vector<32x32xf32>
    %74 = arith.subf %70, %73 : vector<32x32xf32>
    %75 = math.exp %74 : vector<32x32xf32>
    %cst_25 = arith.constant dense<0.000000e+00> : vector<32xf32>
    %76 = vector.multi_reduction <add>, %75, %cst_25 [1] : vector<32x32xf32> to vector<32xf32>
    %77 = vector.shape_cast %76 : vector<32xf32> to vector<32x1xf32>
    %78 = tpu.reciprocal %77 {approx = true} : vector<32x1xf32> -> vector<32x1xf32>
    %79 = vector.broadcast %78 : vector<32x1xf32> to vector<32x32xf32>
    %80 = arith.mulf %75, %79 : vector<32x32xf32>
    %81 = arith.truncf %80 : vector<32x32xf32> to vector<32x32xbf16>
    %cst_26 = arith.constant dense<0.000000e+00> : vector<32x32xf32>
    %82 = tpu.matmul %81, %65, %cst_26 {dimension_numbers = #tpu.dot_dimension_numbers<[1], [0], [0], [1], [0, 0, 1, 1], [], []>} : vector<32x32xbf16>, vector<32x32xbf16>, vector<32x32xf32> -> vector<32x32xf32>
    %83 = vector.extract_strided_slice %33 {offsets = [0, 64], sizes = [32, 32], strides = [1, 1]} : vector<32x128xbf16> to vector<32x32xbf16>
    %84 = vector.extract_strided_slice %34 {offsets = [0, 64], sizes = [32, 32], strides = [1, 1]} : vector<32x128xbf16> to vector<32x32xbf16>
    %85 = vector.extract_strided_slice %35 {offsets = [0, 64], sizes = [32, 32], strides = [1, 1]} : vector<32x128xbf16> to vector<32x32xbf16>
    %cst_27 = arith.constant dense<0.000000e+00> : vector<32x32xf32>
    %86 = tpu.matmul %83, %84, %cst_27 {dimension_numbers = #tpu.dot_dimension_numbers<[1], [1], [0], [0], [0, 0, 1, 0], [], []>} : vector<32x32xbf16>, vector<32x32xbf16>, vector<32x32xf32> -> vector<32x32xf32>
    %cst_28 = arith.constant 0.176776692 : f32
    %87 = vector.broadcast %cst_28 : f32 to vector<32x32xf32>
    %88 = arith.mulf %86, %87 : vector<32x32xf32>
    %cst_29 = arith.constant -1.000000e+30 : f32
    %89 = vector.broadcast %cst_29 : f32 to vector<32x32xf32>
    %90 = arith.select %42, %88, %89 : vector<32x32xi1>, vector<32x32xf32>
    %cst_30 = arith.constant dense<0xFF800000> : vector<32xf32>
    %91 = vector.multi_reduction <maximumf>, %90, %cst_30 [1] : vector<32x32xf32> to vector<32xf32>
    %92 = vector.shape_cast %91 : vector<32xf32> to vector<32x1xf32>
    %93 = vector.broadcast %92 : vector<32x1xf32> to vector<32x32xf32>
    %94 = arith.subf %90, %93 : vector<32x32xf32>
    %95 = math.exp %94 : vector<32x32xf32>
    %cst_31 = arith.constant dense<0.000000e+00> : vector<32xf32>
    %96 = vector.multi_reduction <add>, %95, %cst_31 [1] : vector<32x32xf32> to vector<32xf32>
    %97 = vector.shape_cast %96 : vector<32xf32> to vector<32x1xf32>
    %98 = tpu.reciprocal %97 {approx = true} : vector<32x1xf32> -> vector<32x1xf32>
    %99 = vector.broadcast %98 : vector<32x1xf32> to vector<32x32xf32>
    %100 = arith.mulf %95, %99 : vector<32x32xf32>
    %101 = arith.truncf %100 : vector<32x32xf32> to vector<32x32xbf16>
    %cst_32 = arith.constant dense<0.000000e+00> : vector<32x32xf32>
    %102 = tpu.matmul %101, %85, %cst_32 {dimension_numbers = #tpu.dot_dimension_numbers<[1], [0], [0], [1], [0, 0, 1, 1], [], []>} : vector<32x32xbf16>, vector<32x32xbf16>, vector<32x32xf32> -> vector<32x32xf32>
    %103 = vector.extract_strided_slice %33 {offsets = [0, 96], sizes = [32, 32], strides = [1, 1]} : vector<32x128xbf16> to vector<32x32xbf16>
    %104 = vector.extract_strided_slice %34 {offsets = [0, 96], sizes = [32, 32], strides = [1, 1]} : vector<32x128xbf16> to vector<32x32xbf16>
    %105 = vector.extract_strided_slice %35 {offsets = [0, 96], sizes = [32, 32], strides = [1, 1]} : vector<32x128xbf16> to vector<32x32xbf16>
    %cst_33 = arith.constant dense<0.000000e+00> : vector<32x32xf32>
    %106 = tpu.matmul %103, %104, %cst_33 {dimension_numbers = #tpu.dot_dimension_numbers<[1], [1], [0], [0], [0, 0, 1, 0], [], []>} : vector<32x32xbf16>, vector<32x32xbf16>, vector<32x32xf32> -> vector<32x32xf32>
    %cst_34 = arith.constant 0.176776692 : f32
    %107 = vector.broadcast %cst_34 : f32 to vector<32x32xf32>
    %108 = arith.mulf %106, %107 : vector<32x32xf32>
    %cst_35 = arith.constant -1.000000e+30 : f32
    %109 = vector.broadcast %cst_35 : f32 to vector<32x32xf32>
    %110 = arith.select %42, %108, %109 : vector<32x32xi1>, vector<32x32xf32>
    %cst_36 = arith.constant dense<0xFF800000> : vector<32xf32>
    %111 = vector.multi_reduction <maximumf>, %110, %cst_36 [1] : vector<32x32xf32> to vector<32xf32>
    %112 = vector.shape_cast %111 : vector<32xf32> to vector<32x1xf32>
    %113 = vector.broadcast %112 : vector<32x1xf32> to vector<32x32xf32>
    %114 = arith.subf %110, %113 : vector<32x32xf32>
    %115 = math.exp %114 : vector<32x32xf32>
    %cst_37 = arith.constant dense<0.000000e+00> : vector<32xf32>
    %116 = vector.multi_reduction <add>, %115, %cst_37 [1] : vector<32x32xf32> to vector<32xf32>
    %117 = vector.shape_cast %116 : vector<32xf32> to vector<32x1xf32>
    %118 = tpu.reciprocal %117 {approx = true} : vector<32x1xf32> -> vector<32x1xf32>
    %119 = vector.broadcast %118 : vector<32x1xf32> to vector<32x32xf32>
    %120 = arith.mulf %115, %119 : vector<32x32xf32>
    %121 = arith.truncf %120 : vector<32x32xf32> to vector<32x32xbf16>
    %cst_38 = arith.constant dense<0.000000e+00> : vector<32x32xf32>
    %122 = tpu.matmul %121, %105, %cst_38 {dimension_numbers = #tpu.dot_dimension_numbers<[1], [0], [0], [1], [0, 0, 1, 1], [], []>} : vector<32x32xbf16>, vector<32x32xbf16>, vector<32x32xf32> -> vector<32x32xf32>
    %123 = tpu.concatenate %62, %82, %102, %122 in 1 : vector<32x32xf32>, vector<32x32xf32>, vector<32x32xf32>, vector<32x32xf32> -> vector<32x128xf32>
    %124 = arith.truncf %123 : vector<32x128xf32> to vector<32x128xbf16>
    %c0_39 = arith.constant 0 : index
    %c0_40 = arith.constant 0 : index
    %125 = vector.load %arg3[%c0_39, %c0_40] : memref<128x128xbf16, #tpu.memory_space<vmem>>, vector<128x128xbf16>
    %cst_41 = arith.constant dense<0.000000e+00> : vector<32x128xf32>
    %126 = tpu.matmul %124, %125, %cst_41 {dimension_numbers = #tpu.dot_dimension_numbers<[1], [0], [0], [1], [0, 0, 1, 1], [], []>} : vector<32x128xbf16>, vector<128x128xbf16>, vector<32x128xf32> -> vector<32x128xf32>
    %127 = vector.broadcast %3 : vector<1x128xf32> to vector<32x128xf32>
    %128 = arith.addf %126, %127 : vector<32x128xf32>
    %129 = arith.addf %0, %128 : vector<32x128xf32>
    %cst_42 = arith.constant dense<0.000000e+00> : vector<32xf32>
    %130 = vector.multi_reduction <add>, %129, %cst_42 [1] : vector<32x128xf32> to vector<32xf32>
    %131 = vector.shape_cast %130 : vector<32xf32> to vector<32x1xf32>
    %cst_43 = arith.constant 1.280000e+02 : f32
    %132 = vector.broadcast %cst_43 : f32 to vector<32x1xf32>
    %133 = arith.divf %131, %132 : vector<32x1xf32>
    %134 = vector.broadcast %133 : vector<32x1xf32> to vector<32x128xf32>
    %135 = arith.subf %129, %134 : vector<32x128xf32>
    %136 = arith.mulf %135, %135 : vector<32x128xf32>
    %cst_44 = arith.constant dense<0.000000e+00> : vector<32xf32>
    %137 = vector.multi_reduction <add>, %136, %cst_44 [1] : vector<32x128xf32> to vector<32xf32>
    %138 = vector.shape_cast %137 : vector<32xf32> to vector<32x1xf32>
    %cst_45 = arith.constant 1.280000e+02 : f32
    %139 = vector.broadcast %cst_45 : f32 to vector<32x1xf32>
    %140 = arith.divf %138, %139 : vector<32x1xf32>
    %141 = vector.broadcast %133 : vector<32x1xf32> to vector<32x128xf32>
    %142 = arith.subf %129, %141 : vector<32x128xf32>
    %cst_46 = arith.constant 9.99999974E-6 : f32
    %143 = vector.broadcast %cst_46 : f32 to vector<32x1xf32>
    %144 = arith.addf %140, %143 : vector<32x1xf32>
    %145 = math.rsqrt %144 : vector<32x1xf32>
    %146 = vector.broadcast %145 : vector<32x1xf32> to vector<32x128xf32>
    %147 = arith.mulf %142, %146 : vector<32x128xf32>
    %148 = vector.broadcast %4 : vector<1x128xf32> to vector<32x128xf32>
    %149 = arith.mulf %147, %148 : vector<32x128xf32>
    %150 = vector.broadcast %5 : vector<1x128xf32> to vector<32x128xf32>
    %151 = arith.addf %149, %150 : vector<32x128xf32>
    %152 = arith.truncf %151 : vector<32x128xf32> to vector<32x128xbf16>
    %c0_47 = arith.constant 0 : index
    %c0_48 = arith.constant 0 : index
    %153 = vector.load %arg4[%c0_47, %c0_48] : memref<128x512xbf16, #tpu.memory_space<vmem>>, vector<128x512xbf16>
    %cst_49 = arith.constant dense<0.000000e+00> : vector<32x512xf32>
    %154 = tpu.matmul %152, %153, %cst_49 {dimension_numbers = #tpu.dot_dimension_numbers<[1], [0], [0], [1], [0, 0, 1, 1], [], []>} : vector<32x128xbf16>, vector<128x512xbf16>, vector<32x512xf32> -> vector<32x512xf32>
    %c0_50 = arith.constant 0 : index
    %c0_51 = arith.constant 0 : index
    %155 = vector.load %arg5[%c0_50, %c0_51] : memref<1x512xf32, #tpu.memory_space<vmem>>, vector<1x512xf32>
    %156 = vector.broadcast %155 : vector<1x512xf32> to vector<32x512xf32>
    %157 = arith.addf %154, %156 : vector<32x512xf32>
    %cst_52 = arith.constant 0.000000e+00 : f32
    %158 = vector.broadcast %cst_52 : f32 to vector<32x512xf32>
    %159 = arith.maximumf %157, %158 : vector<32x512xf32>
    %160 = arith.truncf %159 : vector<32x512xf32> to vector<32x512xbf16>
    %c0_53 = arith.constant 0 : index
    %c0_54 = arith.constant 0 : index
    %161 = vector.load %arg6[%c0_53, %c0_54] : memref<512x128xbf16, #tpu.memory_space<vmem>>, vector<512x128xbf16>
    %cst_55 = arith.constant dense<0.000000e+00> : vector<32x128xf32>
    %162 = tpu.matmul %160, %161, %cst_55 {dimension_numbers = #tpu.dot_dimension_numbers<[1], [0], [0], [1], [0, 0, 1, 1], [], []>} : vector<32x512xbf16>, vector<512x128xbf16>, vector<32x128xf32> -> vector<32x128xf32>
    %163 = vector.broadcast %6 : vector<1x128xf32> to vector<32x128xf32>
    %164 = arith.addf %162, %163 : vector<32x128xf32>
    %165 = arith.addf %129, %164 : vector<32x128xf32>
    %c0_56 = arith.constant 0 : index
    %c0_57 = arith.constant 0 : index
    %166 = vector.load %arg8[%c0_56, %c0_57] : memref<32x128xf32, #tpu.memory_space<vmem>>, vector<32x128xf32>
    tpu.vector_store %arg8[%c0_56, %c0_57], %165 {strides = array<i32>} : memref<32x128xf32, #tpu.memory_space<vmem>>, vector<32x128xf32>,
    return
  }
  func.func @transform_0(%arg0: i32) -> (i32, i32) {
    %c0_i32 = arith.constant 0 : i32
    %c0_i32_0 = arith.constant 0 : i32
    %c0_i32_1 = arith.constant 0 : i32
    return %c0_i32, %c0_i32_0 : i32, i32
  }
  func.func @transform_1(%arg0: i32) -> (i32, i32) {
    %c0_i32 = arith.constant 0 : i32
    %c0_i32_0 = arith.constant 0 : i32
    %c0_i32_1 = arith.constant 0 : i32
    return %c0_i32, %c0_i32_0 : i32, i32
  }
  func.func @transform_2(%arg0: i32) -> (i32, i32) {
    %c0_i32 = arith.constant 0 : i32
    %c0_i32_0 = arith.constant 0 : i32
    %c0_i32_1 = arith.constant 0 : i32
    return %c0_i32, %c0_i32_0 : i32, i32
  }
  func.func @transform_3(%arg0: i32) -> (i32, i32) {
    %c0_i32 = arith.constant 0 : i32
    %c0_i32_0 = arith.constant 0 : i32
    %c0_i32_1 = arith.constant 0 : i32
    return %c0_i32, %c0_i32_0 : i32, i32
  }
  func.func @transform_4(%arg0: i32) -> (i32, i32) {
    %c0_i32 = arith.constant 0 : i32
    %c0_i32_0 = arith.constant 0 : i32
    %c0_i32_1 = arith.constant 0 : i32
    return %c0_i32, %c0_i32_0 : i32, i32
  }
  func.func @transform_5(%arg0: i32) -> (i32, i32) {
    %c0_i32 = arith.constant 0 : i32
    %c0_i32_0 = arith.constant 0 : i32
    %c0_i32_1 = arith.constant 0 : i32
    return %c0_i32, %c0_i32_0 : i32, i32
  }
  func.func @transform_6(%arg0: i32) -> (i32, i32) {
    %c0_i32 = arith.constant 0 : i32
    %c0_i32_0 = arith.constant 0 : i32
    %c0_i32_1 = arith.constant 0 : i32
    return %c0_i32, %c0_i32_0 : i32, i32
  }
  func.func @transform_7(%arg0: i32) -> (i32, i32) {
    %c0_i32 = arith.constant 0 : i32
    %c0_i32_0 = arith.constant 0 : i32
    %c0_i32_1 = arith.constant 0 : i32
    return %c0_i32, %c0_i32_0 : i32, i32
  }
}

</mosaic_0001>

<llo_original>
// kernel: tpu_custom_call.1
$region0: #{tpu_custom_call.1}
  #allocation0 [shape = 'u32[]', space=smem, size = 0x4, offset = 0x4, fixed_abs, tag = 'smem constant byte address 0x4 - core index']
  #allocation1 [shape = 'u32[72,128]{1,0:T(1,128)}', space=vmem, size = 0x9000, scoped, tag = 'internal scratch']
  %s0 = inlined_call_operand.hbm [shape: f32[32,128], index: 0, kind: input, shape index: {}]
  %s1 = inlined_call_operand.hbm [shape: bf16[128,384], index: 1, kind: input, shape index: {}]
  %s2 = inlined_call_operand.hbm [shape: bf16[128,128], index: 2, kind: input, shape index: {}]
  %s3 = inlined_call_operand.hbm [shape: bf16[128,512], index: 3, kind: input, shape index: {}]
  %s4 = inlined_call_operand.hbm [shape: f32[1,512], index: 4, kind: input, shape index: {}]
  %s5 = inlined_call_operand.hbm [shape: bf16[512,128], index: 5, kind: input, shape index: {}]
  %s6 = inlined_call_operand.hbm [shape: f32[6,128], index: 6, kind: input, shape index: {}]
  %s7 = inlined_call_operand.hbm [shape: f32[32,128], index: 7, kind: output, shape index: {}]
  %s8 = sld [smem:[#allocation0]]
  $region66: #{tpu_custom_call.1} parent=0
    _
  %s10 = ssub.s32 1, %s8
  %s11 = scalar_select 0, %s10, %s8
  $region1: #{tpu_custom_call.1} parent=0
    #allocation2 [shape = 'u8[16384]{0}', space=vmem, size = 0x4000, scoped, tag = 'input window, operand 0, single buffered']
    #allocation3 [shape = 's32[1]{0}', space=sflag, size = 0x4, scoped, tag = 'scoped memory for tpu_custom_call.1']
    #allocation4 [shape = 's32[1]{0}', space=sflag, size = 0x4, scoped, tag = 'scoped memory for tpu_custom_call.1']
    #allocation5 [shape = 'u8[98304]{0}', space=vmem, size = 0x18000, scoped, tag = 'input window, operand 1, single buffered']
    #allocation6 [shape = 's32[1]{0}', space=sflag, size = 0x4, scoped, tag = 'scoped memory for tpu_custom_call.1']
    #allocation7 [shape = 'u8[32768]{0}', space=vmem, size = 0x8000, scoped, tag = 'input window, operand 2, single buffered']
    #allocation8 [shape = 'u8[131072]{0}', space=vmem, size = 0x20000, scoped, tag = 'input window, operand 3, single buffered']
    #allocation9 [shape = 's32[1]{0}', space=sflag, size = 0x4, scoped, tag = 'scoped memory for tpu_custom_call.1']
    #allocation10 [shape = 'u8[2048]{0}', space=vmem, size = 0x800, scoped, tag = 'input window, operand 4, single buffered']
    #allocation11 [shape = 'u8[131072]{0}', space=vmem, size = 0x20000, scoped, tag = 'input window, operand 5, single buffered']
    #allocation12 [shape = 's32[1]{0}', space=sflag, size = 0x4, scoped, tag = 'scoped memory for tpu_custom_call.1']
    #allocation13 [shape = 'u8[4096]{0}', space=vmem, size = 0x1000, scoped, tag = 'input window, operand 6, single buffered']
    #allocation14 [shape = 'u8[16384]{0}', space=vmem, size = 0x4000, scoped, tag = 'output window, operand 0, single buffered']
    %12 = vsyncpa [#allocation3], 0
    %13 = vsyncpa [#allocation6], 0
    %14 = vsyncpa [#allocation9], 0
    %15 = vsyncpa [#allocation12], 0
    %16 = vsyncpa [#allocation4], 0
    // Predicated region
    $region2: #{tpu_custom_call.1} parent=1 // pred_check
      _
    $region3: #{tpu_custom_call.1} parent=1 // pred_check_branch
      %18 = sbr.rel (0) target = $region5
    $region4: #{tpu_custom_call.1} parent=1 // pred_region
      %20 = vsyncadd [#allocation3], 0
      %s21 = sshll.u32 %s0, 4
      %s22 = int_to_ptr.hbm [resolvable:$true] %s21
      %s23 = sshll.u32 [#allocation2], 4
      %s24 = int_to_ptr.vmem [resolvable:$true] %s23
      %29 = dma.hbm_to_vmem [thread:$0]  %s22, 512, %s24, [#allocation3], 128, 128, 8
    $region5: #{tpu_custom_call.1} parent=1 // pred_fallthru
      _
    // Predicated region
    $region6: #{tpu_custom_call.1} parent=1 // pred_check
      _
    $region7: #{tpu_custom_call.1} parent=1 // pred_check_branch
      %31 = sbr.rel (0) target = $region9
    $region8: #{tpu_custom_call.1} parent=1 // pred_region
      %33 = vsyncadd [#allocation6], 0
      %s34 = sshll.u32 %s1, 4
      %s35 = int_to_ptr.hbm [resolvable:$true] %s34
      %s36 = sshll.u32 [#allocation5], 4
      %s37 = int_to_ptr.vmem [resolvable:$true] %s36
      %42 = dma.hbm_to_vmem [thread:$0]  %s35, 3072, %s37, [#allocation6], 192, 192, 12
    $region9: #{tpu_custom_call.1} parent=1 // pred_fallthru
      _
    // Predicated region
    $region10: #{tpu_custom_call.1} parent=1 // pred_check
      _
    $region11: #{tpu_custom_call.1} parent=1 // pred_check_branch
      %44 = sbr.rel (0) target = $region13
    $region12: #{tpu_custom_call.1} parent=1 // pred_region
      %46 = vsyncadd [#allocation6], 0
      %s47 = sshll.u32 %s2, 4
      %s48 = int_to_ptr.hbm [resolvable:$true] %s47
      %s49 = sshll.u32 [#allocation7], 4
      %s50 = int_to_ptr.vmem [resolvable:$true] %s49
      %55 = dma.hbm_to_vmem [thread:$0]  %s48, 1024, %s50, [#allocation6], 64, 64, 4
    $region13: #{tpu_custom_call.1} parent=1 // pred_fallthru
      _
    // Predicated region
    $region14: #{tpu_custom_call.1} parent=1 // pred_check
      _
    $region15: #{tpu_custom_call.1} parent=1 // pred_check_branch
      %57 = sbr.rel (0) target = $region17
    $region16: #{tpu_custom_call.1} parent=1 // pred_region
      %59 = vsyncadd [#allocation9], 0
      %s60 = sshll.u32 %s3, 4
      %s61 = int_to_ptr.hbm [resolvable:$true] %s60
      %s62 = sshll.u32 [#allocation8], 4
      %s63 = int_to_ptr.vmem [resolvable:$true] %s62
      %68 = dma.hbm_to_vmem [thread:$0]  %s61, 4096, %s63, [#allocation9], 256, 256, 16
    $region17: #{tpu_custom_call.1} parent=1 // pred_fallthru
      _
    // Predicated region
    $region18: #{tpu_custom_call.1} parent=1 // pred_check
      _
    $region19: #{tpu_custom_call.1} parent=1 // pred_check_branch
      %70 = sbr.rel (0) target = $region21
    $region20: #{tpu_custom_call.1} parent=1 // pred_region
      %72 = vsyncadd [#allocation9], 0
      %s74 = sshll.u32 %s4, 4
      %s75 = int_to_ptr.hbm [resolvable:$true] %s74
      %s76 = sshll.u32 [#allocation10], 4
      %s77 = int_to_ptr.vmem [resolvable:$true] %s76
      %79 = dma.hbm_to_vmem [thread:$0]  %s75, 64, %s77, [#allocation9]
    $region21: #{tpu_custom_call.1} parent=1 // pred_fallthru
      _
    // Predicated region
    $region22: #{tpu_custom_call.1} parent=1 // pred_check
      _
    $region23: #{tpu_custom_call.1} parent=1 // pred_check_branch
      %81 = sbr.rel (0) target = $region25
    $region24: #{tpu_custom_call.1} parent=1 // pred_region
      %83 = vsyncadd [#allocation12], 0
      %s84 = sshll.u32 %s5, 4
      %s85 = int_to_ptr.hbm [resolvable:$true] %s84
      %s86 = sshll.u32 [#allocation11], 4
      %s87 = int_to_ptr.vmem [resolvable:$true] %s86
      %92 = dma.hbm_to_vmem [thread:$0]  %s85, 4096, %s87, [#allocation12], 64, 64, 4
    $region25: #{tpu_custom_call.1} parent=1 // pred_fallthru
      _
    // Predicated region
    $region26: #{tpu_custom_call.1} parent=1 // pred_check
      _
    $region27: #{tpu_custom_call.1} parent=1 // pred_check_branch
      %94 = sbr.rel (0) target = $region29
    $region28: #{tpu_custom_call.1} parent=1 // pred_region
      %96 = vsyncadd [#allocation12], 0
      %s98 = sshll.u32 %s6, 4
      %s99 = int_to_ptr.hbm [resolvable:$true] %s98
      %s100 = sshll.u32 [#allocation13], 4
      %s101 = int_to_ptr.vmem [resolvable:$true] %s100
      %103 = dma.hbm_to_vmem [thread:$0]  %s99, 128, %s101, [#allocation12]
    $region29: #{tpu_custom_call.1} parent=1 // pred_fallthru
      _
    // Predicated region
    $region30: #{tpu_custom_call.1} parent=1 // pred_check
      _
    $region31: #{tpu_custom_call.1} parent=1 // pred_check_branch
      %105 = sbr.rel (0) target = $region33
    $region32: #{tpu_custom_call.1} parent=1 // pred_region
      %107 = dma.done [#allocation3], 512
    $region33: #{tpu_custom_call.1} parent=1 // pred_fallthru
      _
    // Predicated region
    $region34: #{tpu_custom_call.1} parent=1 // pred_check
      _
    $region35: #{tpu_custom_call.1} parent=1 // pred_check_branch
      %109 = sbr.rel (0) target = $region37
    $region36: #{tpu_custom_call.1} parent=1 // pred_region
      %111 = dma.done [#allocation6], 3072
    $region37: #{tpu_custom_call.1} parent=1 // pred_fallthru
      _
    // Predicated region
    $region38: #{tpu_custom_call.1} parent=1 // pred_check
      _
    $region39: #{tpu_custom_call.1} parent=1 // pred_check_branch
      %113 = sbr.rel (0) target = $region41
    $region40: #{tpu_custom_call.1} parent=1 // pred_region
      %115 = dma.done [#allocation6], 1024
    $region41: #{tpu_custom_call.1} parent=1 // pred_fallthru
      _
    // Predicated region
    $region42: #{tpu_custom_call.1} parent=1 // pred_check
      _
    $region43: #{tpu_custom_call.1} parent=1 // pred_check_branch
      %117 = sbr.rel (0) target = $region45
    $region44: #{tpu_custom_call.1} parent=1 // pred_region
      %119 = dma.done [#allocation9], 4096
    $region45: #{tpu_custom_call.1} parent=1 // pred_fallthru
      _
    // Predicated region
    $region46: #{tpu_custom_call.1} parent=1 // pred_check
      _
    $region47: #{tpu_custom_call.1} parent=1 // pred_check_branch
      %121 = sbr.rel (0) target = $region49
    $region48: #{tpu_custom_call.1} parent=1 // pred_region
      %123 = dma.done [#allocation9], 64
    $region49: #{tpu_custom_call.1} parent=1 // pred_fallthru
      _
    // Predicated region
    $region50: #{tpu_custom_call.1} parent=1 // pred_check
      _
    $region51: #{tpu_custom_call.1} parent=1 // pred_check_branch
      %125 = sbr.rel (0) target = $region53
    $region52: #{tpu_custom_call.1} parent=1 // pred_region
      %127 = dma.done [#allocation12], 4096
    $region53: #{tpu_custom_call.1} parent=1 // pred_fallthru
      _
    // Predicated region
    $region54: #{tpu_custom_call.1} parent=1 // pred_check
      _
    $region55: #{tpu_custom_call.1} parent=1 // pred_check_branch
      %129 = sbr.rel (0) target = $region57
    $region56: #{tpu_custom_call.1} parent=1 // pred_region
      %131 = dma.done [#allocation12], 128
    $region57: #{tpu_custom_call.1} parent=1 // pred_fallthru
      _
    %v133 = vld [vmem:[#allocation2] sm:$0xff]
    %v134 = vld [vmem:[#allocation2 + $0x8] sm:$0xff]
    %v135 = vld [vmem:[#allocation2 + $0x10] sm:$0xff]
    %v136 = vld [vmem:[#allocation2 + $0x18] sm:$0xff]
    %v137 = vld [vmem:[#allocation13] sm:$0x1]
    %v138 = vld [vmem:[#allocation13 + $0x1] sm:$0x1]
    %v139 = vld [vmem:[#allocation13 + $0x2] sm:$0x1]
    %v140 = vld [vmem:[#allocation13 + $0x3] sm:$0x1]
    %v141 = vld [vmem:[#allocation13 + $0x4] sm:$0x1]
    %v142 = vld [vmem:[#allocation13 + $0x5] sm:$0x1]
    %143 = vadd.xlane.f32.xlu0 %v133
    %v144 = vpop.xlane.xlu0 %143
    %145 = vadd.xlane.f32.xlu0 %v134
    %v146 = vpop.xlane.xlu0 %145
    %147 = vadd.xlane.f32.xlu0 %v135
    %v148 = vpop.xlane.xlu0 %147
    %149 = vadd.xlane.f32.xlu0 %v136
    %v150 = vpop.xlane.xlu0 %149
    %v151 = vrcp.pop 128.0
    %v152 = vmul.f32 128.0, %v151
    %v153 = vsub.f32 1.0, %v152
    %v154 = vmul.f32 %v151, %v153
    %v155 = vadd.f32 %v151, %v154
    %vm156 = vweird.f32 %v151
    %v157 = vsel %vm156, %v151, %v155
    %v158 = vmul.f32 %v144, %v157
    %v159 = vmul.f32 %v146, %v157
    %v160 = vmul.f32 %v148, %v157
    %v161 = vmul.f32 %v150, %v157
    %v162 = vsub.f32 %v133, %v158
    %v163 = vsub.f32 %v134, %v159
    %v164 = vsub.f32 %v135, %v160
    %v165 = vsub.f32 %v136, %v161
    %v166 = vmul.f32 %v162, %v162
    %v167 = vmul.f32 %v163, %v163
    %v168 = vmul.f32 %v164, %v164
    %v169 = vmul.f32 %v165, %v165
    %170 = vadd.xlane.f32.xlu0 %v166
    %v171 = vpop.xlane.xlu0 %170
    %172 = vadd.xlane.f32.xlu0 %v167
    %v173 = vpop.xlane.xlu0 %172
    %174 = vadd.xlane.f32.xlu0 %v168
    %v175 = vpop.xlane.xlu0 %174
    %176 = vadd.xlane.f32.xlu0 %v169
    %v177 = vpop.xlane.xlu0 %176
    %v178 = vmul.f32 %v171, %v157
    %v179 = vmul.f32 %v173, %v157
    %v180 = vmul.f32 %v175, %v157
    %v181 = vmul.f32 %v177, %v157
    %v182 = vadd.f32 %v178, 1e-05
    %v183 = vadd.f32 %v179, 1e-05
    %v184 = vadd.f32 %v180, 1e-05
    %v185 = vadd.f32 %v181, 1e-05
    %v186 = vrsqrt.pop %v182
    %v187 = vmul.f32 %v186, %v182
    %v188 = vmul.f32 %v187, %v186
    %v189 = vmul.f32 0.5, %v188
    %v190 = vsub.f32 1.5, %v189
    %v191 = vmul.f32 %v186, %v190
    %vm192 = vweird.f32 %v182
    %vm193 = vweird.f32 %v186
    %vm194 = vmor %vm192, %vm193
    %v195 = vsel %vm194, %v186, %v191
    %v196 = vrsqrt.pop %v183
    %v197 = vmul.f32 %v196, %v183
    %v198 = vmul.f32 %v197, %v196
    %v199 = vmul.f32 0.5, %v198
    %v200 = vsub.f32 1.5, %v199
    %v201 = vmul.f32 %v196, %v200
    %vm202 = vweird.f32 %v183
    %vm203 = vweird.f32 %v196
    %vm204 = vmor %vm202, %vm203
    %v205 = vsel %vm204, %v196, %v201
    %v206 = vrsqrt.pop %v184
    %v207 = vmul.f32 %v206, %v184
    %v208 = vmul.f32 %v207, %v206
    %v209 = vmul.f32 0.5, %v208
    %v210 = vsub.f32 1.5, %v209
    %v211 = vmul.f32 %v206, %v210
    %vm212 = vweird.f32 %v184
    %vm213 = vweird.f32 %v206
    %vm214 = vmor %vm212, %vm213
    %v215 = vsel %vm214, %v206, %v211
    %v216 = vrsqrt.pop %v185
    %v217 = vmul.f32 %v216, %v185
    %v218 = vmul.f32 %v217, %v216
    %v219 = vmul.f32 0.5, %v218
    %v220 = vsub.f32 1.5, %v219
    %v221 = vmul.f32 %v216, %v220
    %vm222 = vweird.f32 %v185
    %vm223 = vweird.f32 %v216
    %vm224 = vmor %vm222, %vm223
    %v225 = vsel %vm224, %v216, %v221
    %v226 = vmul.f32 %v162, %v195
    %v227 = vmul.f32 %v163, %v205
    %v228 = vmul.f32 %v164, %v215
    %v229 = vmul.f32 %v165, %v225
    %v230 = vperm.slane %v137, 0
    %v231 = vmul.f32 %v226, %v230
    %v232 = vmul.f32 %v227, %v230
    %v233 = vmul.f32 %v228, %v230
    %v234 = vmul.f32 %v229, %v230
    %v235 = vperm.slane %v138, 0
    %v236 = vadd.f32 %v231, %v235
    %v237 = vadd.f32 %v232, %v235
    %v238 = vadd.f32 %v233, %v235
    %v239 = vadd.f32 %v234, %v235
    %v240 = vpack.c.bf16 %v237, %v236
    %v241 = vpack.c.bf16 %v239, %v238
    %v242 = vld [vmem:[#allocation5] sm:$0xff]
    %v243 = vld [vmem:[#allocation5 + $0x8] sm:$0xf]
    %v244 = vld [vmem:[#allocation5 + $0xc] sm:$0xff]
    %v245 = vld [vmem:[#allocation5 + $0x14] sm:$0xf]
    %v246 = vld [vmem:[#allocation5 + $0x18] sm:$0xff]
    %v247 = vld [vmem:[#allocation5 + $0x20] sm:$0xf]
    %v248 = vld [vmem:[#allocation5 + $0x24] sm:$0xff]
    %v249 = vld [vmem:[#allocation5 + $0x2c] sm:$0xf]
    %v250 = vld [vmem:[#allocation5 + $0x30] sm:$0xff]
    %v251 = vld [vmem:[#allocation5 + $0x38] sm:$0xf]
    %v252 = vld [vmem:[#allocation5 + $0x3c] sm:$0xff]
    %v253 = vld [vmem:[#allocation5 + $0x44] sm:$0xf]
    %v254 = vld [vmem:[#allocation5 + $0x48] sm:$0xff]
    %v255 = vld [vmem:[#allocation5 + $0x50] sm:$0xf]
    %v256 = vld [vmem:[#allocation5 + $0x54] sm:$0xff]
    %v257 = vld [vmem:[#allocation5 + $0x5c] sm:$0xf]
    %v258 = vld [vmem:[#allocation5 + $0x60] sm:$0xff]
    %v259 = vld [vmem:[#allocation5 + $0x68] sm:$0xf]
    %v260 = vld [vmem:[#allocation5 + $0x6c] sm:$0xff]
    %v261 = vld [vmem:[#allocation5 + $0x74] sm:$0xf]
    %v262 = vld [vmem:[#allocation5 + $0x78] sm:$0xff]
    %v263 = vld [vmem:[#allocation5 + $0x80] sm:$0xf]
    %v264 = vld [vmem:[#allocation5 + $0x84] sm:$0xff]
    %v265 = vld [vmem:[#allocation5 + $0x8c] sm:$0xf]
    %v266 = vld [vmem:[#allocation5 + $0x90] sm:$0xff]
    %v267 = vld [vmem:[#allocation5 + $0x98] sm:$0xf]
    %v268 = vld [vmem:[#allocation5 + $0x9c] sm:$0xff]
    %v269 = vld [vmem:[#allocation5 + $0xa4] sm:$0xf]
    %v270 = vld [vmem:[#allocation5 + $0xa8] sm:$0xff]
    %v271 = vld [vmem:[#allocation5 + $0xb0] sm:$0xf]
    %v272 = vld [vmem:[#allocation5 + $0xb4] sm:$0xff]
    %v273 = vld [vmem:[#allocation5 + $0xbc] sm:$0xf]
    %v306 = vunpack.c.l.b16 %v242
    %v307 = vunpack.c.h.b16 %v242
    %v308 = vunpack.c.l.b16 %v243
    %v309 = vunpack.c.l.b16 %v244
    %v310 = vunpack.c.h.b16 %v244
    %v311 = vunpack.c.l.b16 %v245
    %v312 = vunpack.c.l.b16 %v246
    %v313 = vunpack.c.h.b16 %v246
    %v314 = vunpack.c.l.b16 %v247
    %v315 = vunpack.c.l.b16 %v248
    %v316 = vunpack.c.h.b16 %v248
    %v317 = vunpack.c.l.b16 %v249
    %v318 = vunpack.c.l.b16 %v250
    %v319 = vunpack.c.h.b16 %v250
    %v320 = vunpack.c.l.b16 %v251
    %v321 = vunpack.c.l.b16 %v252
    %v322 = vunpack.c.h.b16 %v252
    %v323 = vunpack.c.l.b16 %v253
    %v324 = vunpack.c.l.b16 %v254
    %v325 = vunpack.c.h.b16 %v254
    %v326 = vunpack.c.l.b16 %v255
    %v327 = vunpack.c.l.b16 %v256
    %v328 = vunpack.c.h.b16 %v256
    %v329 = vunpack.c.l.b16 %v257
    %v330 = vunpack.c.l.b16 %v258
    %v331 = vunpack.c.h.b16 %v258
    %v332 = vunpack.c.l.b16 %v259
    %v333 = vunpack.c.l.b16 %v260
    %v334 = vunpack.c.h.b16 %v260
    %v335 = vunpack.c.l.b16 %v261
    %v336 = vunpack.c.l.b16 %v262
    %v337 = vunpack.c.h.b16 %v262
    %v338 = vunpack.c.l.b16 %v263
    %v339 = vunpack.c.l.b16 %v264
    %v340 = vunpack.c.h.b16 %v264
    %v341 = vunpack.c.l.b16 %v265
    %v342 = vunpack.c.l.b16 %v266
    %v343 = vunpack.c.h.b16 %v266
    %v344 = vunpack.c.l.b16 %v267
    %v345 = vunpack.c.l.b16 %v268
    %v346 = vunpack.c.h.b16 %v268
    %v347 = vunpack.c.l.b16 %v269
    %v348 = vunpack.c.l.b16 %v270
    %v349 = vunpack.c.h.b16 %v270
    %v350 = vunpack.c.l.b16 %v271
    %v351 = vunpack.c.l.b16 %v272
    %v352 = vunpack.c.h.b16 %v272
    %v353 = vunpack.c.l.b16 %v273
    %v354 = vpack.c.b16 %v309, %v306
    %v355 = vpack.c.b16 %v310, %v307
    %v356 = vpack.c.b16 %v311, %v308
    %v357 = vpack.c.b16 %v315, %v312
    %v358 = vpack.c.b16 %v316, %v313
    %v359 = vpack.c.b16 %v317, %v314
    %v360 = vpack.c.b16 %v321, %v318
    %v361 = vpack.c.b16 %v322, %v319
    %v362 = vpack.c.b16 %v323, %v320
    %v363 = vpack.c.b16 %v327, %v324
    %v364 = vpack.c.b16 %v328, %v325
    %v365 = vpack.c.b16 %v329, %v326
    %v366 = vpack.c.b16 %v333, %v330
    %v367 = vpack.c.b16 %v334, %v331
    %v368 = vpack.c.b16 %v335, %v332
    %v369 = vpack.c.b16 %v339, %v336
    %v370 = vpack.c.b16 %v340, %v337
    %v371 = vpack.c.b16 %v341, %v338
    %v372 = vpack.c.b16 %v345, %v342
    %v373 = vpack.c.b16 %v346, %v343
    %v374 = vpack.c.b16 %v347, %v344
    %v375 = vpack.c.b16 %v351, %v348
    %v376 = vpack.c.b16 %v352, %v349
    %v377 = vpack.c.b16 %v353, %v350
    %402 = vmatpush.bf16.msra.mxu0 %v375
    %403 = vmatpush.bf16.msra.mxu0 %v372
    %404 = vmatpush.bf16.msra.mxu0 %v369
    %405 = vmatpush.bf16.msra.mxu0 %v366
    %406 = vmatpush.bf16.msra.mxu0 %v363
    %407 = vmatpush.bf16.msra.mxu0 %v360
    %408 = vmatpush.bf16.msra.mxu0 %v357
    %409 = vmatpush.bf16.msra.mxu0 %v354
    %410 = vmatmul.bf16.gmra.mxu0 %v240
    %v411 = vpop.f32.mrf.mxu0
    %v412 = vadd.f32 0.0, %v411
    %v413 = vpop.f32.mrf.mxu0
    %v414 = vadd.f32 0.0, %v413
    %415 = vmatmul.bf16.gmra.mxu0 %v241
    %v416 = vpop.f32.mrf.mxu0
    %v417 = vadd.f32 0.0, %v416
    %v418 = vpop.f32.mrf.mxu0
    %v419 = vadd.f32 0.0, %v418
    %420 = vdwg.mxu0
    %421 = vmatpush.bf16.msra.mxu0 %v376
    %422 = vmatpush.bf16.msra.mxu0 %v373
    %423 = vmatpush.bf16.msra.mxu0 %v370
    %424 = vmatpush.bf16.msra.mxu0 %v367
    %425 = vmatpush.bf16.msra.mxu0 %v364
    %426 = vmatpush.bf16.msra.mxu0 %v361
    %427 = vmatpush.bf16.msra.mxu0 %v358
    %428 = vmatpush.bf16.msra.mxu0 %v355
    %429 = vmatmul.bf16.gmra.mxu0 %v240
    %v430 = vpop.f32.mrf.mxu0
    %v431 = vadd.f32 0.0, %v430
    %v432 = vpop.f32.mrf.mxu0
    %v433 = vadd.f32 0.0, %v432
    %434 = vmatmul.bf16.gmra.mxu0 %v241
    %v435 = vpop.f32.mrf.mxu0
    %v436 = vadd.f32 0.0, %v435
    %v437 = vpop.f32.mrf.mxu0
    %v438 = vadd.f32 0.0, %v437
    %439 = vdwg.mxu0
    %440 = vmatpush.bf16.msra.mxu0 %v377
    %441 = vmatpush.bf16.msra.mxu0 %v374
    %442 = vmatpush.bf16.msra.mxu0 %v371
    %443 = vmatpush.bf16.msra.mxu0 %v368
    %444 = vmatpush.bf16.msra.mxu0 %v365
    %445 = vmatpush.bf16.msra.mxu0 %v362
    %446 = vmatpush.bf16.msra.mxu0 %v359
    %447 = vmatpush.bf16.msra.mxu0 %v356
    %448 = vmatmul.bf16.gmra.mxu0 %v240
    %v449 = vpop.f32.mrf.mxu0
    %v450 = vadd.f32 0.0, %v449
    %v451 = vpop.f32.mrf.mxu0
    %v452 = vadd.f32 0.0, %v451
    %453 = vmatmul.bf16.gmra.mxu0 %v241
    %v454 = vpop.f32.mrf.mxu0
    %v455 = vadd.f32 0.0, %v454
    %v456 = vpop.f32.mrf.mxu0
    %v457 = vadd.f32 0.0, %v456
    %458 = vdwg.mxu0
    %v459 = vpack.c.bf16 %v431, %v412
    %v460 = vpack.c.bf16 %v450, %v450
    %v461 = vpack.c.bf16 %v433, %v414
    %v462 = vpack.c.bf16 %v452, %v452
    %v463 = vpack.c.bf16 %v436, %v417
    %v464 = vpack.c.bf16 %v455, %v455
    %v465 = vpack.c.bf16 %v438, %v419
    %v466 = vpack.c.bf16 %v457, %v457
    %v467 = vlaneseq
    %v468 = vshrl.u32 %v467, 7
    %v469 = vadd.s32 %v468, 8
    %v470 = vadd.s32 %v468, 16
    %v471 = vadd.s32 %v468, 24
    %v472 = vlaneseq
    %v473 = vand.u32 %v472, 127
    %v474 = vand.u32 %v468, 4294967280
    %v475 = vand.u32 %v469, 4294967280
    %v476 = vand.u32 %v470, 4294967280
    %v477 = vand.u32 %v471, 4294967280
    %vm478 = vcmp.le.s32.totalorder %v473, %v468
    %vm479 = vcmp.le.s32.totalorder %v473, %v469
    %vm480 = vcmp.le.s32.totalorder %v473, %v470
    %vm481 = vcmp.le.s32.totalorder %v473, %v471
    %vm482 = vcmp.ge.s32.totalorder %v473, %v474
    %vm483 = vcmp.ge.s32.totalorder %v473, %v475
    %vm484 = vcmp.ge.s32.totalorder %v473, %v476
    %vm485 = vcmp.ge.s32.totalorder %v473, %v477
    %vm486 = vmand %vm478, %vm482
    %vm487 = vmand %vm479, %vm483
    %vm488 = vmand %vm480, %vm484
    %vm489 = vmand %vm481, %vm485
    %v494 = vunpack.c.l.b16 %v459
    %v495 = vunpack.c.l.b16 %v461
    %v496 = vunpack.c.l.b16 %v463
    %v497 = vunpack.c.l.b16 %v465
    %v498 = vpack.c.b16 %v495, %v494
    %v499 = vpack.c.b16 %v497, %v496
    %v500 = vunpack.c.h.b16 %v459
    %v501 = vunpack.c.h.b16 %v461
    %v502 = vunpack.c.h.b16 %v463
    %v503 = vunpack.c.h.b16 %v465
    %v504 = vpack.c.b16 %v501, %v500
    %v505 = vpack.c.b16 %v503, %v502
    %vm506 = vcmask 261120
    %v508 = vsel %vm506, %v498, 0
    %v511 = vsel %vm506, %v499, 0
    %v514 = vsel %vm506, %v504, 0
    %v517 = vsel %vm506, %v505, 0
    %519 = vmatpush.bf16.xpose.msra.mxu0 0
    %520 = vmatpush.bf16.xpose.msra.mxu0 0
    %521 = vmatpush.bf16.xpose.msra.mxu0 0
    %522 = vmatpush.bf16.xpose.msra.mxu0 0
    %523 = vmatpush.bf16.xpose.msra.mxu0 0
    %524 = vmatpush.bf16.xpose.msra.mxu0 0
    %525 = vmatpush.bf16.xpose.msra.mxu0 %v517
    %526 = vmatpush.bf16.xpose.msra.mxu0 %v514
    %527 = vmatmul.bf16.gmra.mxu0 %v508
    %v528 = vpop.f32.mrf.mxu0
    %v529 = vadd.f32 0.0, %v528
    %v530 = vpop.f32.mrf.mxu0
    %v531 = vadd.f32 0.0, %v530
    %532 = vmatmul.bf16.gmra.mxu0 %v511
    %v533 = vpop.f32.mrf.mxu0
    %v534 = vadd.f32 0.0, %v533
    %v535 = vpop.f32.mrf.mxu0
    %v536 = vadd.f32 0.0, %v535
    %537 = vdwg.mxu0
    %v538 = vmul.f32 %v529, 0.17677669
    %v539 = vmul.f32 %v531, 0.17677669
    %v540 = vmul.f32 %v534, 0.17677669
    %v541 = vmul.f32 %v536, 0.17677669
    %v542 = vsel %vm486, %v538, -1e+30
    %v543 = vsel %vm487, %v539, -1e+30
    %v544 = vsel %vm488, %v540, -1e+30
    %v545 = vsel %vm489, %v541, -1e+30
    %v546 = vsel %vm506, %v542, -inf
    %547 = vmax.xlane.f32.xlu0 %v546
    %v548 = vpop.xlane.xlu0 %547
    %v549 = vsel %vm506, %v543, -inf
    %550 = vmax.xlane.f32.xlu0 %v549
    %v551 = vpop.xlane.xlu0 %550
    %v552 = vsel %vm506, %v544, -inf
    %553 = vmax.xlane.f32.xlu0 %v552
    %v554 = vpop.xlane.xlu0 %553
    %v555 = vsel %vm506, %v545, -inf
    %556 = vmax.xlane.f32.xlu0 %v555
    %v557 = vpop.xlane.xlu0 %556
    %v558 = vsub.f32 %v542, %v548
    %v559 = vsub.f32 %v543, %v551
    %v560 = vsub.f32 %v544, %v554
    %v561 = vsub.f32 %v545, %v557
    %v562 = vmul.f32 %v558, 1.442695
    %v563 = vpow.pop %v562
    %v564 = vmul.f32 %v559, 1.442695
    %v565 = vpow.pop %v564
    %v566 = vmul.f32 %v560, 1.442695
    %v567 = vpow.pop %v566
    %v568 = vmul.f32 %v561, 1.442695
    %v569 = vpow.pop %v568
    %v570 = vsel %vm506, %v563, 0.0
    %571 = vadd.xlane.f32.xlu0 %v570
    %v572 = vpop.xlane.xlu0 %571
    %v573 = vsel %vm506, %v565, 0.0
    %574 = vadd.xlane.f32.xlu0 %v573
    %v575 = vpop.xlane.xlu0 %574
    %v576 = vsel %vm506, %v567, 0.0
    %577 = vadd.xlane.f32.xlu0 %v576
    %v578 = vpop.xlane.xlu0 %577
    %v579 = vsel %vm506, %v569, 0.0
    %580 = vadd.xlane.f32.xlu0 %v579
    %v581 = vpop.xlane.xlu0 %580
    %v582 = vrcp.pop %v572
    %v583 = vrcp.pop %v575
    %v584 = vrcp.pop %v578
    %v585 = vrcp.pop %v581
    %v586 = vmul.f32 %v563, %v582
    %v587 = vmul.f32 %v565, %v583
    %v588 = vmul.f32 %v567, %v584
    %v589 = vmul.f32 %v569, %v585
    %v590 = vpack.c.bf16 %v587, %v586
    %v591 = vpack.c.bf16 %v589, %v588
    %v596 = vunpack.c.l.b16 %v460
    %v597 = vunpack.c.l.b16 %v462
    %v598 = vunpack.c.l.b16 %v464
    %v599 = vunpack.c.l.b16 %v466
    %v600 = vpack.c.b16 %v597, %v596
    %v601 = vpack.c.b16 %v599, %v598
    %v605 = vsel %vm506, %v590, 0
    %v608 = vsel %vm506, %v591, 0
    %610 = vmatpush.bf16.msra.mxu0 0
    %611 = vmatpush.bf16.msra.mxu0 0
    %612 = vmatpush.bf16.msra.mxu0 0
    %613 = vmatpush.bf16.msra.mxu0 0
    %614 = vmatpush.bf16.msra.mxu0 0
    %615 = vmatpush.bf16.msra.mxu0 0
    %616 = vmatpush.bf16.msra.mxu0 %v601
    %617 = vmatpush.bf16.msra.mxu0 %v600
    %618 = vmatmul.bf16.gmra.mxu0 %v605
    %v619 = vpop.f32.mrf.mxu0
    %v620 = vadd.f32 0.0, %v619
    %v621 = vpop.f32.mrf.mxu0
    %v622 = vadd.f32 0.0, %v621
    %623 = vmatmul.bf16.gmra.mxu0 %v608
    %v624 = vpop.f32.mrf.mxu0
    %v625 = vadd.f32 0.0, %v624
    %v626 = vpop.f32.mrf.mxu0
    %v627 = vadd.f32 0.0, %v626
    %628 = vdwg.mxu0
    %629 = vrot.lane.b32.xlu0 %v498, 96
    %v630 = vpop.permute.xlu0 %629
    %631 = vrot.lane.b32.xlu0 %v499, 96
    %v632 = vpop.permute.xlu0 %631
    %633 = vrot.lane.b32.xlu0 %v504, 96
    %v634 = vpop.permute.xlu0 %633
    %635 = vrot.lane.b32.xlu0 %v505, 96
    %v636 = vpop.permute.xlu0 %635
    %v638 = vsel %vm506, %v630, 0
    %v641 = vsel %vm506, %v632, 0
    %v644 = vsel %vm506, %v634, 0
    %v647 = vsel %vm506, %v636, 0
    %649 = vmatpush.bf16.xpose.msra.mxu0 0
    %650 = vmatpush.bf16.xpose.msra.mxu0 0
    %651 = vmatpush.bf16.xpose.msra.mxu0 0
    %652 = vmatpush.bf16.xpose.msra.mxu0 0
    %653 = vmatpush.bf16.xpose.msra.mxu0 0
    %654 = vmatpush.bf16.xpose.msra.mxu0 0
    %655 = vmatpush.bf16.xpose.msra.mxu0 %v647
    %656 = vmatpush.bf16.xpose.msra.mxu0 %v644
    %657 = vmatmul.bf16.gmra.mxu0 %v638
    %v658 = vpop.f32.mrf.mxu0
    %v659 = vadd.f32 0.0, %v658
    %v660 = vpop.f32.mrf.mxu0
    %v661 = vadd.f32 0.0, %v660
    %662 = vmatmul.bf16.gmra.mxu0 %v641
    %v663 = vpop.f32.mrf.mxu0
    %v664 = vadd.f32 0.0, %v663
    %v665 = vpop.f32.mrf.mxu0
    %v666 = vadd.f32 0.0, %v665
    %667 = vdwg.mxu0
    %v668 = vmul.f32 %v659, 0.17677669
    %v669 = vmul.f32 %v661, 0.17677669
    %v670 = vmul.f32 %v664, 0.17677669
    %v671 = vmul.f32 %v666, 0.17677669
    %v672 = vsel %vm486, %v668, -1e+30
    %v673 = vsel %vm487, %v669, -1e+30
    %v674 = vsel %vm488, %v670, -1e+30
    %v675 = vsel %vm489, %v671, -1e+30
    %v676 = vsel %vm506, %v672, -inf
    %677 = vmax.xlane.f32.xlu0 %v676
    %v678 = vpop.xlane.xlu0 %677
    %v679 = vsel %vm506, %v673, -inf
    %680 = vmax.xlane.f32.xlu0 %v679
    %v681 = vpop.xlane.xlu0 %680
    %v682 = vsel %vm506, %v674, -inf
    %683 = vmax.xlane.f32.xlu0 %v682
    %v684 = vpop.xlane.xlu0 %683
    %v685 = vsel %vm506, %v675, -inf
    %686 = vmax.xlane.f32.xlu0 %v685
    %v687 = vpop.xlane.xlu0 %686
    %v688 = vsub.f32 %v672, %v678
    %v689 = vsub.f32 %v673, %v681
    %v690 = vsub.f32 %v674, %v684
    %v691 = vsub.f32 %v675, %v687
    %v692 = vmul.f32 %v688, 1.442695
    %v693 = vpow.pop %v692
    %v694 = vmul.f32 %v689, 1.442695
    %v695 = vpow.pop %v694
    %v696 = vmul.f32 %v690, 1.442695
    %v697 = vpow.pop %v696
    %v698 = vmul.f32 %v691, 1.442695
    %v699 = vpow.pop %v698
    %v700 = vsel %vm506, %v693, 0.0
    %701 = vadd.xlane.f32.xlu0 %v700
    %v702 = vpop.xlane.xlu0 %701
    %v703 = vsel %vm506, %v695, 0.0
    %704 = vadd.xlane.f32.xlu0 %v703
    %v705 = vpop.xlane.xlu0 %704
    %v706 = vsel %vm506, %v697, 0.0
    %707 = vadd.xlane.f32.xlu0 %v706
    %v708 = vpop.xlane.xlu0 %707
    %v709 = vsel %vm506, %v699, 0.0
    %710 = vadd.xlane.f32.xlu0 %v709
    %v711 = vpop.xlane.xlu0 %710
    %v712 = vrcp.pop %v702
    %v713 = vrcp.pop %v705
    %v714 = vrcp.pop %v708
    %v715 = vrcp.pop %v711
    %v716 = vmul.f32 %v693, %v712
    %v717 = vmul.f32 %v695, %v713
    %v718 = vmul.f32 %v697, %v714
    %v719 = vmul.f32 %v699, %v715
    %v720 = vpack.c.bf16 %v717, %v716
    %v721 = vpack.c.bf16 %v719, %v718
    %722 = vrot.lane.b32.xlu0 %v600, 96
    %v723 = vpop.permute.xlu0 %722
    %724 = vrot.lane.b32.xlu0 %v601, 96
    %v725 = vpop.permute.xlu0 %724
    %v729 = vsel %vm506, %v720, 0
    %v732 = vsel %vm506, %v721, 0
    %734 = vmatpush.bf16.msra.mxu0 0
    %735 = vmatpush.bf16.msra.mxu0 0
    %736 = vmatpush.bf16.msra.mxu0 0
    %737 = vmatpush.bf16.msra.mxu0 0
    %738 = vmatpush.bf16.msra.mxu0 0
    %739 = vmatpush.bf16.msra.mxu0 0
    %740 = vmatpush.bf16.msra.mxu0 %v725
    %741 = vmatpush.bf16.msra.mxu0 %v723
    %742 = vmatmul.bf16.gmra.mxu0 %v729
    %v743 = vpop.f32.mrf.mxu0
    %v744 = vadd.f32 0.0, %v743
    %v745 = vpop.f32.mrf.mxu0
    %v746 = vadd.f32 0.0, %v745
    %747 = vmatmul.bf16.gmra.mxu0 %v732
    %v748 = vpop.f32.mrf.mxu0
    %v749 = vadd.f32 0.0, %v748
    %v750 = vpop.f32.mrf.mxu0
    %v751 = vadd.f32 0.0, %v750
    %752 = vdwg.mxu0
    %753 = vrot.lane.b32.xlu0 %v498, 64
    %v754 = vpop.permute.xlu0 %753
    %755 = vrot.lane.b32.xlu0 %v499, 64
    %v756 = vpop.permute.xlu0 %755
    %757 = vrot.lane.b32.xlu0 %v504, 64
    %v758 = vpop.permute.xlu0 %757
    %759 = vrot.lane.b32.xlu0 %v505, 64
    %v760 = vpop.permute.xlu0 %759
    %v762 = vsel %vm506, %v754, 0
    %v765 = vsel %vm506, %v756, 0
    %v768 = vsel %vm506, %v758, 0
    %v771 = vsel %vm506, %v760, 0
    %773 = vmatpush.bf16.xpose.msra.mxu0 0
    %774 = vmatpush.bf16.xpose.msra.mxu0 0
    %775 = vmatpush.bf16.xpose.msra.mxu0 0
    %776 = vmatpush.bf16.xpose.msra.mxu0 0
    %777 = vmatpush.bf16.xpose.msra.mxu0 0
    %778 = vmatpush.bf16.xpose.msra.mxu0 0
    %779 = vmatpush.bf16.xpose.msra.mxu0 %v771
    %780 = vmatpush.bf16.xpose.msra.mxu0 %v768
    %781 = vmatmul.bf16.gmra.mxu0 %v762
    %v782 = vpop.f32.mrf.mxu0
    %v783 = vadd.f32 0.0, %v782
    %v784 = vpop.f32.mrf.mxu0
    %v785 = vadd.f32 0.0, %v784
    %786 = vmatmul.bf16.gmra.mxu0 %v765
    %v787 = vpop.f32.mrf.mxu0
    %v788 = vadd.f32 0.0, %v787
    %v789 = vpop.f32.mrf.mxu0
    %v790 = vadd.f32 0.0, %v789
    %791 = vdwg.mxu0
    %v792 = vmul.f32 %v783, 0.17677669
    %v793 = vmul.f32 %v785, 0.17677669
    %v794 = vmul.f32 %v788, 0.17677669
    %v795 = vmul.f32 %v790, 0.17677669
    %v796 = vsel %vm486, %v792, -1e+30
    %v797 = vsel %vm487, %v793, -1e+30
    %v798 = vsel %vm488, %v794, -1e+30
    %v799 = vsel %vm489, %v795, -1e+30
    %v800 = vsel %vm506, %v796, -inf
    %801 = vmax.xlane.f32.xlu0 %v800
    %v802 = vpop.xlane.xlu0 %801
    %v803 = vsel %vm506, %v797, -inf
    %804 = vmax.xlane.f32.xlu0 %v803
    %v805 = vpop.xlane.xlu0 %804
    %v806 = vsel %vm506, %v798, -inf
    %807 = vmax.xlane.f32.xlu0 %v806
    %v808 = vpop.xlane.xlu0 %807
    %v809 = vsel %vm506, %v799, -inf
    %810 = vmax.xlane.f32.xlu0 %v809
    %v811 = vpop.xlane.xlu0 %810
    %v812 = vsub.f32 %v796, %v802
    %v813 = vsub.f32 %v797, %v805
    %v814 = vsub.f32 %v798, %v808
    %v815 = vsub.f32 %v799, %v811
    %v816 = vmul.f32 %v812, 1.442695
    %v817 = vpow.pop %v816
    %v818 = vmul.f32 %v813, 1.442695
    %v819 = vpow.pop %v818
    %v820 = vmul.f32 %v814, 1.442695
    %v821 = vpow.pop %v820
    %v822 = vmul.f32 %v815, 1.442695
    %v823 = vpow.pop %v822
    %v824 = vsel %vm506, %v817, 0.0
    %825 = vadd.xlane.f32.xlu0 %v824
    %v826 = vpop.xlane.xlu0 %825
    %v827 = vsel %vm506, %v819, 0.0
    %828 = vadd.xlane.f32.xlu0 %v827
    %v829 = vpop.xlane.xlu0 %828
    %v830 = vsel %vm506, %v821, 0.0
    %831 = vadd.xlane.f32.xlu0 %v830
    %v832 = vpop.xlane.xlu0 %831
    %v833 = vsel %vm506, %v823, 0.0
    %834 = vadd.xlane.f32.xlu0 %v833
    %v835 = vpop.xlane.xlu0 %834
    %v836 = vrcp.pop %v826
    %v837 = vrcp.pop %v829
    %v838 = vrcp.pop %v832
    %v839 = vrcp.pop %v835
    %v840 = vmul.f32 %v817, %v836
    %v841 = vmul.f32 %v819, %v837
    %v842 = vmul.f32 %v821, %v838
    %v843 = vmul.f32 %v823, %v839
    %v844 = vpack.c.bf16 %v841, %v840
    %v845 = vpack.c.bf16 %v843, %v842
    %846 = vrot.lane.b32.xlu0 %v600, 64
    %v847 = vpop.permute.xlu0 %846
    %848 = vrot.lane.b32.xlu0 %v601, 64
    %v849 = vpop.permute.xlu0 %848
    %v853 = vsel %vm506, %v844, 0
    %v856 = vsel %vm506, %v845, 0
    %858 = vmatpush.bf16.msra.mxu0 0
    %859 = vmatpush.bf16.msra.mxu0 0
    %860 = vmatpush.bf16.msra.mxu0 0
    %861 = vmatpush.bf16.msra.mxu0 0
    %862 = vmatpush.bf16.msra.mxu0 0
    %863 = vmatpush.bf16.msra.mxu0 0
    %864 = vmatpush.bf16.msra.mxu0 %v849
    %865 = vmatpush.bf16.msra.mxu0 %v847
    %866 = vmatmul.bf16.gmra.mxu0 %v853
    %v867 = vpop.f32.mrf.mxu0
    %v868 = vadd.f32 0.0, %v867
    %v869 = vpop.f32.mrf.mxu0
    %v870 = vadd.f32 0.0, %v869
    %871 = vmatmul.bf16.gmra.mxu0 %v856
    %v872 = vpop.f32.mrf.mxu0
    %v873 = vadd.f32 0.0, %v872
    %v874 = vpop.f32.mrf.mxu0
    %v875 = vadd.f32 0.0, %v874
    %876 = vdwg.mxu0
    %877 = vrot.lane.b32.xlu0 %v498, 32
    %v878 = vpop.permute.xlu0 %877
    %879 = vrot.lane.b32.xlu0 %v499, 32
    %v880 = vpop.permute.xlu0 %879
    %881 = vrot.lane.b32.xlu0 %v504, 32
    %v882 = vpop.permute.xlu0 %881
    %883 = vrot.lane.b32.xlu0 %v505, 32
    %v884 = vpop.permute.xlu0 %883
    %v886 = vsel %vm506, %v878, 0
    %v889 = vsel %vm506, %v880, 0
    %v892 = vsel %vm506, %v882, 0
    %v895 = vsel %vm506, %v884, 0
    %897 = vmatpush.bf16.xpose.msra.mxu0 0
    %898 = vmatpush.bf16.xpose.msra.mxu0 0
    %899 = vmatpush.bf16.xpose.msra.mxu0 0
    %900 = vmatpush.bf16.xpose.msra.mxu0 0
    %901 = vmatpush.bf16.xpose.msra.mxu0 0
    %902 = vmatpush.bf16.xpose.msra.mxu0 0
    %903 = vmatpush.bf16.xpose.msra.mxu0 %v895
    %904 = vmatpush.bf16.xpose.msra.mxu0 %v892
    %905 = vmatmul.bf16.gmra.mxu0 %v886
    %v906 = vpop.f32.mrf.mxu0
    %v907 = vadd.f32 0.0, %v906
    %v908 = vpop.f32.mrf.mxu0
    %v909 = vadd.f32 0.0, %v908
    %910 = vmatmul.bf16.gmra.mxu0 %v889
    %v911 = vpop.f32.mrf.mxu0
    %v912 = vadd.f32 0.0, %v911
    %v913 = vpop.f32.mrf.mxu0
    %v914 = vadd.f32 0.0, %v913
    %915 = vdwg.mxu0
    %v916 = vmul.f32 %v907, 0.17677669
    %v917 = vmul.f32 %v909, 0.17677669
    %v918 = vmul.f32 %v912, 0.17677669
    %v919 = vmul.f32 %v914, 0.17677669
    %v920 = vsel %vm486, %v916, -1e+30
    %v921 = vsel %vm487, %v917, -1e+30
    %v922 = vsel %vm488, %v918, -1e+30
    %v923 = vsel %vm489, %v919, -1e+30
    %v924 = vsel %vm506, %v920, -inf
    %925 = vmax.xlane.f32.xlu0 %v924
    %v926 = vpop.xlane.xlu0 %925
    %v927 = vsel %vm506, %v921, -inf
    %928 = vmax.xlane.f32.xlu0 %v927
    %v929 = vpop.xlane.xlu0 %928
    %v930 = vsel %vm506, %v922, -inf
    %931 = vmax.xlane.f32.xlu0 %v930
    %v932 = vpop.xlane.xlu0 %931
    %v933 = vsel %vm506, %v923, -inf
    %934 = vmax.xlane.f32.xlu0 %v933
    %v935 = vpop.xlane.xlu0 %934
    %v936 = vsub.f32 %v920, %v926
    %v937 = vsub.f32 %v921, %v929
    %v938 = vsub.f32 %v922, %v932
    %v939 = vsub.f32 %v923, %v935
    %v940 = vmul.f32 %v936, 1.442695
    %v941 = vpow.pop %v940
    %v942 = vmul.f32 %v937, 1.442695
    %v943 = vpow.pop %v942
    %v944 = vmul.f32 %v938, 1.442695
    %v945 = vpow.pop %v944
    %v946 = vmul.f32 %v939, 1.442695
    %v947 = vpow.pop %v946
    %v948 = vsel %vm506, %v941, 0.0
    %949 = vadd.xlane.f32.xlu0 %v948
    %v950 = vpop.xlane.xlu0 %949
    %v951 = vsel %vm506, %v943, 0.0
    %952 = vadd.xlane.f32.xlu0 %v951
    %v953 = vpop.xlane.xlu0 %952
    %v954 = vsel %vm506, %v945, 0.0
    %955 = vadd.xlane.f32.xlu0 %v954
    %v956 = vpop.xlane.xlu0 %955
    %v957 = vsel %vm506, %v947, 0.0
    %958 = vadd.xlane.f32.xlu0 %v957
    %v959 = vpop.xlane.xlu0 %958
    %v960 = vrcp.pop %v950
    %v961 = vrcp.pop %v953
    %v962 = vrcp.pop %v956
    %v963 = vrcp.pop %v959
    %v964 = vmul.f32 %v941, %v960
    %v965 = vmul.f32 %v943, %v961
    %v966 = vmul.f32 %v945, %v962
    %v967 = vmul.f32 %v947, %v963
    %v968 = vpack.c.bf16 %v965, %v964
    %v969 = vpack.c.bf16 %v967, %v966
    %970 = vrot.lane.b32.xlu0 %v600, 32
    %v971 = vpop.permute.xlu0 %970
    %972 = vrot.lane.b32.xlu0 %v601, 32
    %v973 = vpop.permute.xlu0 %972
    %v977 = vsel %vm506, %v968, 0
    %v980 = vsel %vm506, %v969, 0
    %982 = vmatpush.bf16.msra.mxu0 0
    %983 = vmatpush.bf16.msra.mxu0 0
    %984 = vmatpush.bf16.msra.mxu0 0
    %985 = vmatpush.bf16.msra.mxu0 0
    %986 = vmatpush.bf16.msra.mxu0 0
    %987 = vmatpush.bf16.msra.mxu0 0
    %988 = vmatpush.bf16.msra.mxu0 %v973
    %989 = vmatpush.bf16.msra.mxu0 %v971
    %990 = vmatmul.bf16.gmra.mxu0 %v977
    %v991 = vpop.f32.mrf.mxu0
    %v992 = vadd.f32 0.0, %v991
    %v993 = vpop.f32.mrf.mxu0
    %v994 = vadd.f32 0.0, %v993
    %995 = vmatmul.bf16.gmra.mxu0 %v980
    %v996 = vpop.f32.mrf.mxu0
    %v997 = vadd.f32 0.0, %v996
    %v998 = vpop.f32.mrf.mxu0
    %v999 = vadd.f32 0.0, %v998
    %1000 = vdwg.mxu0
    %1005 = vrot.lane.b32.xlu0 %v744, 32
    %v1006 = vpop.permute.xlu0 %1005
    %1007 = vrot.lane.b32.xlu0 %v746, 32
    %v1008 = vpop.permute.xlu0 %1007
    %1009 = vrot.lane.b32.xlu0 %v749, 32
    %v1010 = vpop.permute.xlu0 %1009
    %1011 = vrot.lane.b32.xlu0 %v751, 32
    %v1012 = vpop.permute.xlu0 %1011
    %1021 = vrot.lane.b32.xlu0 %v868, 64
    %v1022 = vpop.permute.xlu0 %1021
    %1023 = vrot.lane.b32.xlu0 %v870, 64
    %v1024 = vpop.permute.xlu0 %1023
    %1025 = vrot.lane.b32.xlu0 %v873, 64
    %v1026 = vpop.permute.xlu0 %1025
    %1027 = vrot.lane.b32.xlu0 %v875, 64
    %v1028 = vpop.permute.xlu0 %1027
    %1037 = vrot.lane.b32.xlu0 %v992, 96
    %v1038 = vpop.permute.xlu0 %1037
    %1039 = vrot.lane.b32.xlu0 %v994, 96
    %v1040 = vpop.permute.xlu0 %1039
    %1041 = vrot.lane.b32.xlu0 %v997, 96
    %v1042 = vpop.permute.xlu0 %1041
    %1043 = vrot.lane.b32.xlu0 %v999, 96
    %v1044 = vpop.permute.xlu0 %1043
    %v1049 = vsel %vm506, %v620, %v1006
    %v1050 = vsel %vm506, %v622, %v1008
    %v1051 = vsel %vm506, %v625, %v1010
    %v1052 = vsel %vm506, %v627, %v1012
    %vm1053 = vcmask 523264
    %v1054 = vsel %vm1053, %v1049, %v1022
    %v1055 = vsel %vm1053, %v1050, %v1024
    %v1056 = vsel %vm1053, %v1051, %v1026
    %v1057 = vsel %vm1053, %v1052, %v1028
    %vm1058 = vcmask 785408
    %v1059 = vsel %vm1058, %v1054, %v1038
    %v1060 = vsel %vm1058, %v1055, %v1040
    %v1061 = vsel %vm1058, %v1056, %v1042
    %v1062 = vsel %vm1058, %v1057, %v1044
    %v1063 = vpack.c.bf16 %v1060, %v1059
    %v1064 = vpack.c.bf16 %v1062, %v1061
    %v1065 = vld [vmem:[#allocation7] sm:$0xf]
    %v1066 = vld [vmem:[#allocation7 + $0x4] sm:$0xf]
    %v1067 = vld [vmem:[#allocation7 + $0x8] sm:$0xf]
    %v1068 = vld [vmem:[#allocation7 + $0xc] sm:$0xf]
    %v1069 = vld [vmem:[#allocation7 + $0x10] sm:$0xf]
    %v1070 = vld [vmem:[#allocation7 + $0x14] sm:$0xf]
    %v1071 = vld [vmem:[#allocation7 + $0x18] sm:$0xf]
    %v1072 = vld [vmem:[#allocation7 + $0x1c] sm:$0xf]
    %v1073 = vld [vmem:[#allocation7 + $0x20] sm:$0xf]
    %v1074 = vld [vmem:[#allocation7 + $0x24] sm:$0xf]
    %v1075 = vld [vmem:[#allocation7 + $0x28] sm:$0xf]
    %v1076 = vld [vmem:[#allocation7 + $0x2c] sm:$0xf]
    %v1077 = vld [vmem:[#allocation7 + $0x30] sm:$0xf]
    %v1078 = vld [vmem:[#allocation7 + $0x34] sm:$0xf]
    %v1079 = vld [vmem:[#allocation7 + $0x38] sm:$0xf]
    %v1080 = vld [vmem:[#allocation7 + $0x3c] sm:$0xf]
    %v1081 = vperm.slane %v139, 0
    %v1098 = vunpack.c.l.b16 %v1065
    %v1099 = vunpack.c.l.b16 %v1066
    %v1100 = vunpack.c.l.b16 %v1067
    %v1101 = vunpack.c.l.b16 %v1068
    %v1102 = vunpack.c.l.b16 %v1069
    %v1103 = vunpack.c.l.b16 %v1070
    %v1104 = vunpack.c.l.b16 %v1071
    %v1105 = vunpack.c.l.b16 %v1072
    %v1106 = vunpack.c.l.b16 %v1073
    %v1107 = vunpack.c.l.b16 %v1074
    %v1108 = vunpack.c.l.b16 %v1075
    %v1109 = vunpack.c.l.b16 %v1076
    %v1110 = vunpack.c.l.b16 %v1077
    %v1111 = vunpack.c.l.b16 %v1078
    %v1112 = vunpack.c.l.b16 %v1079
    %v1113 = vunpack.c.l.b16 %v1080
    %v1114 = vpack.c.b16 %v1099, %v1098
    %v1115 = vpack.c.b16 %v1101, %v1100
    %v1116 = vpack.c.b16 %v1103, %v1102
    %v1117 = vpack.c.b16 %v1105, %v1104
    %v1118 = vpack.c.b16 %v1107, %v1106
    %v1119 = vpack.c.b16 %v1109, %v1108
    %v1120 = vpack.c.b16 %v1111, %v1110
    %v1121 = vpack.c.b16 %v1113, %v1112
    %1130 = vmatpush.bf16.msra.mxu0 %v1121
    %1131 = vmatpush.bf16.msra.mxu0 %v1120
    %1132 = vmatpush.bf16.msra.mxu0 %v1119
    %1133 = vmatpush.bf16.msra.mxu0 %v1118
    %1134 = vmatpush.bf16.msra.mxu0 %v1117
    %1135 = vmatpush.bf16.msra.mxu0 %v1116
    %1136 = vmatpush.bf16.msra.mxu0 %v1115
    %1137 = vmatpush.bf16.msra.mxu0 %v1114
    %1138 = vmatmul.bf16.gmra.mxu0 %v1063
    %v1139 = vpop.f32.mrf.mxu0
    %v1140 = vadd.f32 %v1081, %v1139
    %v1141 = vpop.f32.mrf.mxu0
    %v1142 = vadd.f32 %v1081, %v1141
    %1143 = vmatmul.bf16.gmra.mxu0 %v1064
    %v1144 = vpop.f32.mrf.mxu0
    %v1145 = vadd.f32 %v1081, %v1144
    %v1146 = vpop.f32.mrf.mxu0
    %v1147 = vadd.f32 %v1081, %v1146
    %1148 = vdwg.mxu0
    %v1149 = vadd.f32 %v133, %v1140
    %v1150 = vadd.f32 %v134, %v1142
    %v1151 = vadd.f32 %v135, %v1145
    %v1152 = vadd.f32 %v136, %v1147
    %1153 = vadd.xlane.f32.xlu0 %v1149
    %v1154 = vpop.xlane.xlu0 %1153
    %1155 = vadd.xlane.f32.xlu0 %v1150
    %v1156 = vpop.xlane.xlu0 %1155
    %1157 = vadd.xlane.f32.xlu0 %v1151
    %v1158 = vpop.xlane.xlu0 %1157
    %1159 = vadd.xlane.f32.xlu0 %v1152
    %v1160 = vpop.xlane.xlu0 %1159
    %v1161 = vmul.f32 %v1154, %v157
    %v1162 = vmul.f32 %v1156, %v157
    %v1163 = vmul.f32 %v1158, %v157
    %v1164 = vmul.f32 %v1160, %v157
    %v1165 = vsub.f32 %v1149, %v1161
    %v1166 = vsub.f32 %v1150, %v1162
    %v1167 = vsub.f32 %v1151, %v1163
    %v1168 = vsub.f32 %v1152, %v1164
    %v1169 = vmul.f32 %v1165, %v1165
    %v1170 = vmul.f32 %v1166, %v1166
    %v1171 = vmul.f32 %v1167, %v1167
    %v1172 = vmul.f32 %v1168, %v1168
    %1173 = vadd.xlane.f32.xlu0 %v1169
    %v1174 = vpop.xlane.xlu0 %1173
    %1175 = vadd.xlane.f32.xlu0 %v1170
    %v1176 = vpop.xlane.xlu0 %1175
    %1177 = vadd.xlane.f32.xlu0 %v1171
    %v1178 = vpop.xlane.xlu0 %1177
    %1179 = vadd.xlane.f32.xlu0 %v1172
    %v1180 = vpop.xlane.xlu0 %1179
    %v1181 = vmul.f32 %v1174, %v157
    %v1182 = vmul.f32 %v1176, %v157
    %v1183 = vmul.f32 %v1178, %v157
    %v1184 = vmul.f32 %v1180, %v157
    %v1185 = vadd.f32 %v1181, 1e-05
    %v1186 = vadd.f32 %v1182, 1e-05
    %v1187 = vadd.f32 %v1183, 1e-05
    %v1188 = vadd.f32 %v1184, 1e-05
    %v1189 = vrsqrt.pop %v1185
    %v1190 = vmul.f32 %v1189, %v1185
    %v1191 = vmul.f32 %v1190, %v1189
    %v1192 = vmul.f32 0.5, %v1191
    %v1193 = vsub.f32 1.5, %v1192
    %v1194 = vmul.f32 %v1189, %v1193
    %vm1195 = vweird.f32 %v1185
    %vm1196 = vweird.f32 %v1189
    %vm1197 = vmor %vm1195, %vm1196
    %v1198 = vsel %vm1197, %v1189, %v1194
    %v1199 = vrsqrt.pop %v1186
    %v1200 = vmul.f32 %v1199, %v1186
    %v1201 = vmul.f32 %v1200, %v1199
    %v1202 = vmul.f32 0.5, %v1201
    %v1203 = vsub.f32 1.5, %v1202
    %v1204 = vmul.f32 %v1199, %v1203
    %vm1205 = vweird.f32 %v1186
    %vm1206 = vweird.f32 %v1199
    %vm1207 = vmor %vm1205, %vm1206
    %v1208 = vsel %vm1207, %v1199, %v1204
    %v1209 = vrsqrt.pop %v1187
    %v1210 = vmul.f32 %v1209, %v1187
    %v1211 = vmul.f32 %v1210, %v1209
    %v1212 = vmul.f32 0.5, %v1211
    %v1213 = vsub.f32 1.5, %v1212
    %v1214 = vmul.f32 %v1209, %v1213
    %vm1215 = vweird.f32 %v1187
    %vm1216 = vweird.f32 %v1209
    %vm1217 = vmor %vm1215, %vm1216
    %v1218 = vsel %vm1217, %v1209, %v1214
    %v1219 = vrsqrt.pop %v1188
    %v1220 = vmul.f32 %v1219, %v1188
    %v1221 = vmul.f32 %v1220, %v1219
    %v1222 = vmul.f32 0.5, %v1221
    %v1223 = vsub.f32 1.5, %v1222
    %v1224 = vmul.f32 %v1219, %v1223
    %vm1225 = vweird.f32 %v1188
    %vm1226 = vweird.f32 %v1219
    %vm1227 = vmor %vm1225, %vm1226
    %v1228 = vsel %vm1227, %v1219, %v1224
    %v1229 = vmul.f32 %v1165, %v1198
    %v1230 = vmul.f32 %v1166, %v1208
    %v1231 = vmul.f32 %v1167, %v1218
    %v1232 = vmul.f32 %v1168, %v1228
    %v1233 = vperm.slane %v140, 0
    %v1234 = vmul.f32 %v1229, %v1233
    %v1235 = vmul.f32 %v1230, %v1233
    %v1236 = vmul.f32 %v1231, %v1233
    %v1237 = vmul.f32 %v1232, %v1233
    %v1238 = vperm.slane %v141, 0
    %v1239 = vadd.f32 %v1234, %v1238
    %v1240 = vadd.f32 %v1235, %v1238
    %v1241 = vadd.f32 %v1236, %v1238
    %v1242 = vadd.f32 %v1237, %v1238
    %v1243 = vpack.c.bf16 %v1240, %v1239
    %v1244 = vpack.c.bf16 %v1242, %v1241
    %v1245 = vld [vmem:[#allocation8] sm:$0xff]
    %v1246 = vld [vmem:[#allocation8 + $0x8] sm:$0xff]
    %v1247 = vld [vmem:[#allocation8 + $0x10] sm:$0xff]
    %v1248 = vld [vmem:[#allocation8 + $0x18] sm:$0xff]
    %v1249 = vld [vmem:[#allocation8 + $0x20] sm:$0xff]
    %v1250 = vld [vmem:[#allocation8 + $0x28] sm:$0xff]
    %v1251 = vld [vmem:[#allocation8 + $0x30] sm:$0xff]
    %v1252 = vld [vmem:[#allocation8 + $0x38] sm:$0xff]
    %v1253 = vld [vmem:[#allocation8 + $0x40] sm:$0xff]
    %v1254 = vld [vmem:[#allocation8 + $0x48] sm:$0xff]
    %v1255 = vld [vmem:[#allocation8 + $0x50] sm:$0xff]
    %v1256 = vld [vmem:[#allocation8 + $0x58] sm:$0xff]
    %v1257 = vld [vmem:[#allocation8 + $0x60] sm:$0xff]
    %v1258 = vld [vmem:[#allocation8 + $0x68] sm:$0xff]
    %v1259 = vld [vmem:[#allocation8 + $0x70] sm:$0xff]
    %v1260 = vld [vmem:[#allocation8 + $0x78] sm:$0xff]
    %v1261 = vld [vmem:[#allocation8 + $0x80] sm:$0xff]
    %v1262 = vld [vmem:[#allocation8 + $0x88] sm:$0xff]
    %v1263 = vld [vmem:[#allocation8 + $0x90] sm:$0xff]
    %v1264 = vld [vmem:[#allocation8 + $0x98] sm:$0xff]
    %v1265 = vld [vmem:[#allocation8 + $0xa0] sm:$0xff]
    %v1266 = vld [vmem:[#allocation8 + $0xa8] sm:$0xff]
    %v1267 = vld [vmem:[#allocation8 + $0xb0] sm:$0xff]
    %v1268 = vld [vmem:[#allocation8 + $0xb8] sm:$0xff]
    %v1269 = vld [vmem:[#allocation8 + $0xc0] sm:$0xff]
    %v1270 = vld [vmem:[#allocation8 + $0xc8] sm:$0xff]
    %v1271 = vld [vmem:[#allocation8 + $0xd0] sm:$0xff]
    %v1272 = vld [vmem:[#allocation8 + $0xd8] sm:$0xff]
    %v1273 = vld [vmem:[#allocation8 + $0xe0] sm:$0xff]
    %v1274 = vld [vmem:[#allocation8 + $0xe8] sm:$0xff]
    %v1275 = vld [vmem:[#allocation8 + $0xf0] sm:$0xff]
    %v1276 = vld [vmem:[#allocation8 + $0xf8] sm:$0xff]
    %v1277 = vld [vmem:[#allocation10] sm:$0xf]
    %v1279 = vperm.slane %v1277, 0
    %v1280 = vperm.slane %v1277, 1
    %v1281 = vperm.slane %v1277, 2
    %v1282 = vperm.slane %v1277, 3
    %v1319 = vunpack.c.l.b16 %v1245
    %v1320 = vunpack.c.h.b16 %v1245
    %v1321 = vunpack.c.l.b16 %v1246
    %v1322 = vunpack.c.h.b16 %v1246
    %v1323 = vunpack.c.l.b16 %v1247
    %v1324 = vunpack.c.h.b16 %v1247
    %v1325 = vunpack.c.l.b16 %v1248
    %v1326 = vunpack.c.h.b16 %v1248
    %v1327 = vunpack.c.l.b16 %v1249
    %v1328 = vunpack.c.h.b16 %v1249
    %v1329 = vunpack.c.l.b16 %v1250
    %v1330 = vunpack.c.h.b16 %v1250
    %v1331 = vunpack.c.l.b16 %v1251
    %v1332 = vunpack.c.h.b16 %v1251
    %v1333 = vunpack.c.l.b16 %v1252
    %v1334 = vunpack.c.h.b16 %v1252
    %v1335 = vunpack.c.l.b16 %v1253
    %v1336 = vunpack.c.h.b16 %v1253
    %v1337 = vunpack.c.l.b16 %v1254
    %v1338 = vunpack.c.h.b16 %v1254
    %v1339 = vunpack.c.l.b16 %v1255
    %v1340 = vunpack.c.h.b16 %v1255
    %v1341 = vunpack.c.l.b16 %v1256
    %v1342 = vunpack.c.h.b16 %v1256
    %v1343 = vunpack.c.l.b16 %v1257
    %v1344 = vunpack.c.h.b16 %v1257
    %v1345 = vunpack.c.l.b16 %v1258
    %v1346 = vunpack.c.h.b16 %v1258
    %v1347 = vunpack.c.l.b16 %v1259
    %v1348 = vunpack.c.h.b16 %v1259
    %v1349 = vunpack.c.l.b16 %v1260
    %v1350 = vunpack.c.h.b16 %v1260
    %v1351 = vunpack.c.l.b16 %v1261
    %v1352 = vunpack.c.h.b16 %v1261
    %v1353 = vunpack.c.l.b16 %v1262
    %v1354 = vunpack.c.h.b16 %v1262
    %v1355 = vunpack.c.l.b16 %v1263
    %v1356 = vunpack.c.h.b16 %v1263
    %v1357 = vunpack.c.l.b16 %v1264
    %v1358 = vunpack.c.h.b16 %v1264
    %v1359 = vunpack.c.l.b16 %v1265
    %v1360 = vunpack.c.h.b16 %v1265
    %v1361 = vunpack.c.l.b16 %v1266
    %v1362 = vunpack.c.h.b16 %v1266
    %v1363 = vunpack.c.l.b16 %v1267
    %v1364 = vunpack.c.h.b16 %v1267
    %v1365 = vunpack.c.l.b16 %v1268
    %v1366 = vunpack.c.h.b16 %v1268
    %v1367 = vunpack.c.l.b16 %v1269
    %v1368 = vunpack.c.h.b16 %v1269
    %v1369 = vunpack.c.l.b16 %v1270
    %v1370 = vunpack.c.h.b16 %v1270
    %v1371 = vunpack.c.l.b16 %v1271
    %v1372 = vunpack.c.h.b16 %v1271
    %v1373 = vunpack.c.l.b16 %v1272
    %v1374 = vunpack.c.h.b16 %v1272
    %v1375 = vunpack.c.l.b16 %v1273
    %v1376 = vunpack.c.h.b16 %v1273
    %v1377 = vunpack.c.l.b16 %v1274
    %v1378 = vunpack.c.h.b16 %v1274
    %v1379 = vunpack.c.l.b16 %v1275
    %v1380 = vunpack.c.h.b16 %v1275
    %v1381 = vunpack.c.l.b16 %v1276
    %v1382 = vunpack.c.h.b16 %v1276
    %v1383 = vpack.c.b16 %v1323, %v1319
    %v1384 = vpack.c.b16 %v1324, %v1320
    %v1385 = vpack.c.b16 %v1325, %v1321
    %v1386 = vpack.c.b16 %v1326, %v1322
    %v1387 = vpack.c.b16 %v1331, %v1327
    %v1388 = vpack.c.b16 %v1332, %v1328
    %v1389 = vpack.c.b16 %v1333, %v1329
    %v1390 = vpack.c.b16 %v1334, %v1330
    %v1391 = vpack.c.b16 %v1339, %v1335
    %v1392 = vpack.c.b16 %v1340, %v1336
    %v1393 = vpack.c.b16 %v1341, %v1337
    %v1394 = vpack.c.b16 %v1342, %v1338
    %v1395 = vpack.c.b16 %v1347, %v1343
    %v1396 = vpack.c.b16 %v1348, %v1344
    %v1397 = vpack.c.b16 %v1349, %v1345
    %v1398 = vpack.c.b16 %v1350, %v1346
    %v1399 = vpack.c.b16 %v1355, %v1351
    %v1400 = vpack.c.b16 %v1356, %v1352
    %v1401 = vpack.c.b16 %v1357, %v1353
    %v1402 = vpack.c.b16 %v1358, %v1354
    %v1403 = vpack.c.b16 %v1363, %v1359
    %v1404 = vpack.c.b16 %v1364, %v1360
    %v1405 = vpack.c.b16 %v1365, %v1361
    %v1406 = vpack.c.b16 %v1366, %v1362
    %v1407 = vpack.c.b16 %v1371, %v1367
    %v1408 = vpack.c.b16 %v1372, %v1368
    %v1409 = vpack.c.b16 %v1373, %v1369
    %v1410 = vpack.c.b16 %v1374, %v1370
    %v1411 = vpack.c.b16 %v1379, %v1375
    %v1412 = vpack.c.b16 %v1380, %v1376
    %v1413 = vpack.c.b16 %v1381, %v1377
    %v1414 = vpack.c.b16 %v1382, %v1378
    %1447 = vmatpush.bf16.msra.mxu0 %v1411
    %1448 = vmatpush.bf16.msra.mxu0 %v1407
    %1449 = vmatpush.bf16.msra.mxu0 %v1403
    %1450 = vmatpush.bf16.msra.mxu0 %v1399
    %1451 = vmatpush.bf16.msra.mxu0 %v1395
    %1452 = vmatpush.bf16.msra.mxu0 %v1391
    %1453 = vmatpush.bf16.msra.mxu0 %v1387
    %1454 = vmatpush.bf16.msra.mxu0 %v1383
    %1455 = vmatmul.bf16.gmra.mxu0 %v1243
    %v1456 = vpop.f32.mrf.mxu0
    %v1457 = vadd.f32 %v1279, %v1456
    %v1458 = vpop.f32.mrf.mxu0
    %v1459 = vadd.f32 %v1279, %v1458
    %1460 = vmatmul.bf16.gmra.mxu0 %v1244
    %v1461 = vpop.f32.mrf.mxu0
    %v1462 = vadd.f32 %v1279, %v1461
    %v1463 = vpop.f32.mrf.mxu0
    %v1464 = vadd.f32 %v1279, %v1463
    %1465 = vdwg.mxu0
    %1466 = vmatpush.bf16.msra.mxu0 %v1412
    %1467 = vmatpush.bf16.msra.mxu0 %v1408
    %1468 = vmatpush.bf16.msra.mxu0 %v1404
    %1469 = vmatpush.bf16.msra.mxu0 %v1400
    %1470 = vmatpush.bf16.msra.mxu0 %v1396
    %1471 = vmatpush.bf16.msra.mxu0 %v1392
    %1472 = vmatpush.bf16.msra.mxu0 %v1388
    %1473 = vmatpush.bf16.msra.mxu0 %v1384
    %1474 = vmatmul.bf16.gmra.mxu0 %v1243
    %v1475 = vpop.f32.mrf.mxu0
    %v1476 = vadd.f32 %v1280, %v1475
    %v1477 = vpop.f32.mrf.mxu0
    %v1478 = vadd.f32 %v1280, %v1477
    %1479 = vmatmul.bf16.gmra.mxu0 %v1244
    %v1480 = vpop.f32.mrf.mxu0
    %v1481 = vadd.f32 %v1280, %v1480
    %v1482 = vpop.f32.mrf.mxu0
    %v1483 = vadd.f32 %v1280, %v1482
    %1484 = vdwg.mxu0
    %1485 = vmatpush.bf16.msra.mxu0 %v1413
    %1486 = vmatpush.bf16.msra.mxu0 %v1409
    %1487 = vmatpush.bf16.msra.mxu0 %v1405
    %1488 = vmatpush.bf16.msra.mxu0 %v1401
    %1489 = vmatpush.bf16.msra.mxu0 %v1397
    %1490 = vmatpush.bf16.msra.mxu0 %v1393
    %1491 = vmatpush.bf16.msra.mxu0 %v1389
    %1492 = vmatpush.bf16.msra.mxu0 %v1385
    %1493 = vmatmul.bf16.gmra.mxu0 %v1243
    %v1494 = vpop.f32.mrf.mxu0
    %v1495 = vadd.f32 %v1281, %v1494
    %v1496 = vpop.f32.mrf.mxu0
    %v1497 = vadd.f32 %v1281, %v1496
    %1498 = vmatmul.bf16.gmra.mxu0 %v1244
    %v1499 = vpop.f32.mrf.mxu0
    %v1500 = vadd.f32 %v1281, %v1499
    %v1501 = vpop.f32.mrf.mxu0
    %v1502 = vadd.f32 %v1281, %v1501
    %1503 = vdwg.mxu0
    %1504 = vmatpush.bf16.msra.mxu0 %v1414
    %1505 = vmatpush.bf16.msra.mxu0 %v1410
    %1506 = vmatpush.bf16.msra.mxu0 %v1406
    %1507 = vmatpush.bf16.msra.mxu0 %v1402
    %1508 = vmatpush.bf16.msra.mxu0 %v1398
    %1509 = vmatpush.bf16.msra.mxu0 %v1394
    %1510 = vmatpush.bf16.msra.mxu0 %v1390
    %1511 = vmatpush.bf16.msra.mxu0 %v1386
    %1512 = vmatmul.bf16.gmra.mxu0 %v1243
    %v1513 = vpop.f32.mrf.mxu0
    %v1514 = vadd.f32 %v1282, %v1513
    %v1515 = vpop.f32.mrf.mxu0
    %v1516 = vadd.f32 %v1282, %v1515
    %1517 = vmatmul.bf16.gmra.mxu0 %v1244
    %v1518 = vpop.f32.mrf.mxu0
    %v1519 = vadd.f32 %v1282, %v1518
    %v1520 = vpop.f32.mrf.mxu0
    %v1521 = vadd.f32 %v1282, %v1520
    %1522 = vdwg.mxu0
    %v1523 = vmax.f32 %v1457, 0.0
    %v1524 = vmax.f32 %v1476, 0.0
    %v1525 = vmax.f32 %v1495, 0.0
    %v1526 = vmax.f32 %v1514, 0.0
    %v1527 = vmax.f32 %v1459, 0.0
    %v1528 = vmax.f32 %v1478, 0.0
    %v1529 = vmax.f32 %v1497, 0.0
    %v1530 = vmax.f32 %v1516, 0.0
    %v1531 = vmax.f32 %v1462, 0.0
    %v1532 = vmax.f32 %v1481, 0.0
    %v1533 = vmax.f32 %v1500, 0.0
    %v1534 = vmax.f32 %v1519, 0.0
    %v1535 = vmax.f32 %v1464, 0.0
    %v1536 = vmax.f32 %v1483, 0.0
    %v1537 = vmax.f32 %v1502, 0.0
    %v1538 = vmax.f32 %v1521, 0.0
    %v1539 = vpack.c.bf16 %v1527, %v1523
    %v1540 = vpack.c.bf16 %v1528, %v1524
    %v1541 = vpack.c.bf16 %v1529, %v1525
    %v1542 = vpack.c.bf16 %v1530, %v1526
    %v1543 = vpack.c.bf16 %v1535, %v1531
    %v1544 = vpack.c.bf16 %v1536, %v1532
    %v1545 = vpack.c.bf16 %v1537, %v1533
    %v1546 = vpack.c.bf16 %v1538, %v1534
    %v1547 = vld [vmem:[#allocation11] sm:$0xf]
    %v1548 = vld [vmem:[#allocation11 + $0x4] sm:$0xf]
    %v1549 = vld [vmem:[#allocation11 + $0x8] sm:$0xf]
    %v1550 = vld [vmem:[#allocation11 + $0xc] sm:$0xf]
    %v1551 = vld [vmem:[#allocation11 + $0x10] sm:$0xf]
    %v1552 = vld [vmem:[#allocation11 + $0x14] sm:$0xf]
    %v1553 = vld [vmem:[#allocation11 + $0x18] sm:$0xf]
    %v1554 = vld [vmem:[#allocation11 + $0x1c] sm:$0xf]
    %v1555 = vld [vmem:[#allocation11 + $0x20] sm:$0xf]
    %v1556 = vld [vmem:[#allocation11 + $0x24] sm:$0xf]
    %v1557 = vld [vmem:[#allocation11 + $0x28] sm:$0xf]
    %v1558 = vld [vmem:[#allocation11 + $0x2c] sm:$0xf]
    %v1559 = vld [vmem:[#allocation11 + $0x30] sm:$0xf]
    %v1560 = vld [vmem:[#allocation11 + $0x34] sm:$0xf]
    %v1561 = vld [vmem:[#allocation11 + $0x38] sm:$0xf]
    %v1562 = vld [vmem:[#allocation11 + $0x3c] sm:$0xf]
    %v1563 = vld [vmem:[#allocation11 + $0x40] sm:$0xf]
    %v1564 = vld [vmem:[#allocation11 + $0x44] sm:$0xf]
    %v1565 = vld [vmem:[#allocation11 + $0x48] sm:$0xf]
    %v1566 = vld [vmem:[#allocation11 + $0x4c] sm:$0xf]
    %v1567 = vld [vmem:[#allocation11 + $0x50] sm:$0xf]
    %v1568 = vld [vmem:[#allocation11 + $0x54] sm:$0xf]
    %v1569 = vld [vmem:[#allocation11 + $0x58] sm:$0xf]
    %v1570 = vld [vmem:[#allocation11 + $0x5c] sm:$0xf]
    %v1571 = vld [vmem:[#allocation11 + $0x60] sm:$0xf]
    %v1572 = vld [vmem:[#allocation11 + $0x64] sm:$0xf]
    %v1573 = vld [vmem:[#allocation11 + $0x68] sm:$0xf]
    %v1574 = vld [vmem:[#allocation11 + $0x6c] sm:$0xf]
    %v1575 = vld [vmem:[#allocation11 + $0x70] sm:$0xf]
    %v1576 = vld [vmem:[#allocation11 + $0x74] sm:$0xf]
    %v1577 = vld [vmem:[#allocation11 + $0x78] sm:$0xf]
    %v1578 = vld [vmem:[#allocation11 + $0x7c] sm:$0xf]
    %v1579 = vld [vmem:[#allocation11 + $0x80] sm:$0xf]
    %v1580 = vld [vmem:[#allocation11 + $0x84] sm:$0xf]
    %v1581 = vld [vmem:[#allocation11 + $0x88] sm:$0xf]
    %v1582 = vld [vmem:[#allocation11 + $0x8c] sm:$0xf]
    %v1583 = vld [vmem:[#allocation11 + $0x90] sm:$0xf]
    %v1584 = vld [vmem:[#allocation11 + $0x94] sm:$0xf]
    %v1585 = vld [vmem:[#allocation11 + $0x98] sm:$0xf]
    %v1586 = vld [vmem:[#allocation11 + $0x9c] sm:$0xf]
    %v1587 = vld [vmem:[#allocation11 + $0xa0] sm:$0xf]
    %v1588 = vld [vmem:[#allocation11 + $0xa4] sm:$0xf]
    %v1589 = vld [vmem:[#allocation11 + $0xa8] sm:$0xf]
    %v1590 = vld [vmem:[#allocation11 + $0xac] sm:$0xf]
    %v1591 = vld [vmem:[#allocation11 + $0xb0] sm:$0xf]
    %v1592 = vld [vmem:[#allocation11 + $0xb4] sm:$0xf]
    %v1593 = vld [vmem:[#allocation11 + $0xb8] sm:$0xf]
    %v1594 = vld [vmem:[#allocation11 + $0xbc] sm:$0xf]
    %v1595 = vld [vmem:[#allocation11 + $0xc0] sm:$0xf]
    %v1596 = vld [vmem:[#allocation11 + $0xc4] sm:$0xf]
    %v1597 = vld [vmem:[#allocation11 + $0xc8] sm:$0xf]
    %v1598 = vld [vmem:[#allocation11 + $0xcc] sm:$0xf]
    %v1599 = vld [vmem:[#allocation11 + $0xd0] sm:$0xf]
    %v1600 = vld [vmem:[#allocation11 + $0xd4] sm:$0xf]
    %v1601 = vld [vmem:[#allocation11 + $0xd8] sm:$0xf]
    %v1602 = vld [vmem:[#allocation11 + $0xdc] sm:$0xf]
    %v1603 = vld [vmem:[#allocation11 + $0xe0] sm:$0xf]
    %v1604 = vld [vmem:[#allocation11 + $0xe4] sm:$0xf]
    %v1605 = vld [vmem:[#allocation11 + $0xe8] sm:$0xf]
    %v1606 = vld [vmem:[#allocation11 + $0xec] sm:$0xf]
    %v1607 = vld [vmem:[#allocation11 + $0xf0] sm:$0xf]
    %v1608 = vld [vmem:[#allocation11 + $0xf4] sm:$0xf]
    %v1609 = vld [vmem:[#allocation11 + $0xf8] sm:$0xf]
    %v1610 = vld [vmem:[#allocation11 + $0xfc] sm:$0xf]
    %v1611 = vperm.slane %v142, 0
    %v1676 = vunpack.c.l.b16 %v1547
    %v1677 = vunpack.c.l.b16 %v1548
    %v1678 = vunpack.c.l.b16 %v1549
    %v1679 = vunpack.c.l.b16 %v1550
    %v1680 = vunpack.c.l.b16 %v1551
    %v1681 = vunpack.c.l.b16 %v1552
    %v1682 = vunpack.c.l.b16 %v1553
    %v1683 = vunpack.c.l.b16 %v1554
    %v1684 = vunpack.c.l.b16 %v1555
    %v1685 = vunpack.c.l.b16 %v1556
    %v1686 = vunpack.c.l.b16 %v1557
    %v1687 = vunpack.c.l.b16 %v1558
    %v1688 = vunpack.c.l.b16 %v1559
    %v1689 = vunpack.c.l.b16 %v1560
    %v1690 = vunpack.c.l.b16 %v1561
    %v1691 = vunpack.c.l.b16 %v1562
    %v1692 = vunpack.c.l.b16 %v1563
    %v1693 = vunpack.c.l.b16 %v1564
    %v1694 = vunpack.c.l.b16 %v1565
    %v1695 = vunpack.c.l.b16 %v1566
    %v1696 = vunpack.c.l.b16 %v1567
    %v1697 = vunpack.c.l.b16 %v1568
    %v1698 = vunpack.c.l.b16 %v1569
    %v1699 = vunpack.c.l.b16 %v1570
    %v1700 = vunpack.c.l.b16 %v1571
    %v1701 = vunpack.c.l.b16 %v1572
    %v1702 = vunpack.c.l.b16 %v1573
    %v1703 = vunpack.c.l.b16 %v1574
    %v1704 = vunpack.c.l.b16 %v1575
    %v1705 = vunpack.c.l.b16 %v1576
    %v1706 = vunpack.c.l.b16 %v1577
    %v1707 = vunpack.c.l.b16 %v1578
    %v1708 = vunpack.c.l.b16 %v1579
    %v1709 = vunpack.c.l.b16 %v1580
    %v1710 = vunpack.c.l.b16 %v1581
    %v1711 = vunpack.c.l.b16 %v1582
    %v1712 = vunpack.c.l.b16 %v1583
    %v1713 = vunpack.c.l.b16 %v1584
    %v1714 = vunpack.c.l.b16 %v1585
    %v1715 = vunpack.c.l.b16 %v1586
    %v1716 = vunpack.c.l.b16 %v1587
    %v1717 = vunpack.c.l.b16 %v1588
    %v1718 = vunpack.c.l.b16 %v1589
    %v1719 = vunpack.c.l.b16 %v1590
    %v1720 = vunpack.c.l.b16 %v1591
    %v1721 = vunpack.c.l.b16 %v1592
    %v1722 = vunpack.c.l.b16 %v1593
    %v1723 = vunpack.c.l.b16 %v1594
    %v1724 = vunpack.c.l.b16 %v1595
    %v1725 = vunpack.c.l.b16 %v1596
    %v1726 = vunpack.c.l.b16 %v1597
    %v1727 = vunpack.c.l.b16 %v1598
    %v1728 = vunpack.c.l.b16 %v1599
    %v1729 = vunpack.c.l.b16 %v1600
    %v1730 = vunpack.c.l.b16 %v1601
    %v1731 = vunpack.c.l.b16 %v1602
    %v1732 = vunpack.c.l.b16 %v1603
    %v1733 = vunpack.c.l.b16 %v1604
    %v1734 = vunpack.c.l.b16 %v1605
    %v1735 = vunpack.c.l.b16 %v1606
    %v1736 = vunpack.c.l.b16 %v1607
    %v1737 = vunpack.c.l.b16 %v1608
    %v1738 = vunpack.c.l.b16 %v1609
    %v1739 = vunpack.c.l.b16 %v1610
    %v1740 = vpack.c.b16 %v1677, %v1676
    %v1741 = vpack.c.b16 %v1679, %v1678
    %v1742 = vpack.c.b16 %v1681, %v1680
    %v1743 = vpack.c.b16 %v1683, %v1682
    %v1744 = vpack.c.b16 %v1685, %v1684
    %v1745 = vpack.c.b16 %v1687, %v1686
    %v1746 = vpack.c.b16 %v1689, %v1688
    %v1747 = vpack.c.b16 %v1691, %v1690
    %v1748 = vpack.c.b16 %v1693, %v1692
    %v1749 = vpack.c.b16 %v1695, %v1694
    %v1750 = vpack.c.b16 %v1697, %v1696
    %v1751 = vpack.c.b16 %v1699, %v1698
    %v1752 = vpack.c.b16 %v1701, %v1700
    %v1753 = vpack.c.b16 %v1703, %v1702
    %v1754 = vpack.c.b16 %v1705, %v1704
    %v1755 = vpack.c.b16 %v1707, %v1706
    %v1756 = vpack.c.b16 %v1709, %v1708
    %v1757 = vpack.c.b16 %v1711, %v1710
    %v1758 = vpack.c.b16 %v1713, %v1712
    %v1759 = vpack.c.b16 %v1715, %v1714
    %v1760 = vpack.c.b16 %v1717, %v1716
    %v1761 = vpack.c.b16 %v1719, %v1718
    %v1762 = vpack.c.b16 %v1721, %v1720
    %v1763 = vpack.c.b16 %v1723, %v1722
    %v1764 = vpack.c.b16 %v1725, %v1724
    %v1765 = vpack.c.b16 %v1727, %v1726
    %v1766 = vpack.c.b16 %v1729, %v1728
    %v1767 = vpack.c.b16 %v1731, %v1730
    %v1768 = vpack.c.b16 %v1733, %v1732
    %v1769 = vpack.c.b16 %v1735, %v1734
    %v1770 = vpack.c.b16 %v1737, %v1736
    %v1771 = vpack.c.b16 %v1739, %v1738
    %1804 = vmatpush.bf16.msra.mxu0 %v1747
    %1805 = vmatpush.bf16.msra.mxu0 %v1746
    %1806 = vmatpush.bf16.msra.mxu0 %v1745
    %1807 = vmatpush.bf16.msra.mxu0 %v1744
    %1808 = vmatpush.bf16.msra.mxu0 %v1743
    %1809 = vmatpush.bf16.msra.mxu0 %v1742
    %1810 = vmatpush.bf16.msra.mxu0 %v1741
    %1811 = vmatpush.bf16.msra.mxu0 %v1740
    %1812 = vmatmul.bf16.gmra.mxu0 %v1539
    %v1813 = vpop.f32.mrf.mxu0
    %v1814 = vadd.f32 %v1611, %v1813
    %v1815 = vpop.f32.mrf.mxu0
    %v1816 = vadd.f32 %v1611, %v1815
    %1817 = vmatmul.bf16.gmra.mxu0 %v1543
    %v1818 = vpop.f32.mrf.mxu0
    %v1819 = vadd.f32 %v1611, %v1818
    %v1820 = vpop.f32.mrf.mxu0
    %v1821 = vadd.f32 %v1611, %v1820
    %1822 = vdwg.mxu0
    %1823 = vmatpush.bf16.msra.mxu0 %v1755
    %1824 = vmatpush.bf16.msra.mxu0 %v1754
    %1825 = vmatpush.bf16.msra.mxu0 %v1753
    %1826 = vmatpush.bf16.msra.mxu0 %v1752
    %1827 = vmatpush.bf16.msra.mxu0 %v1751
    %1828 = vmatpush.bf16.msra.mxu0 %v1750
    %1829 = vmatpush.bf16.msra.mxu0 %v1749
    %1830 = vmatpush.bf16.msra.mxu0 %v1748
    %1831 = vmatmul.bf16.gmra.mxu0 %v1540
    %v1832 = vpop.f32.mrf.mxu0
    %v1833 = vadd.f32 %v1814, %v1832
    %v1834 = vpop.f32.mrf.mxu0
    %v1835 = vadd.f32 %v1816, %v1834
    %1836 = vmatmul.bf16.gmra.mxu0 %v1544
    %v1837 = vpop.f32.mrf.mxu0
    %v1838 = vadd.f32 %v1819, %v1837
    %v1839 = vpop.f32.mrf.mxu0
    %v1840 = vadd.f32 %v1821, %v1839
    %1841 = vdwg.mxu0
    %1842 = vmatpush.bf16.msra.mxu0 %v1763
    %1843 = vmatpush.bf16.msra.mxu0 %v1762
    %1844 = vmatpush.bf16.msra.mxu0 %v1761
    %1845 = vmatpush.bf16.msra.mxu0 %v1760
    %1846 = vmatpush.bf16.msra.mxu0 %v1759
    %1847 = vmatpush.bf16.msra.mxu0 %v1758
    %1848 = vmatpush.bf16.msra.mxu0 %v1757
    %1849 = vmatpush.bf16.msra.mxu0 %v1756
    %1850 = vmatmul.bf16.gmra.mxu0 %v1541
    %v1851 = vpop.f32.mrf.mxu0
    %v1852 = vadd.f32 %v1833, %v1851
    %v1853 = vpop.f32.mrf.mxu0
    %v1854 = vadd.f32 %v1835, %v1853
    %1855 = vmatmul.bf16.gmra.mxu0 %v1545
    %v1856 = vpop.f32.mrf.mxu0
    %v1857 = vadd.f32 %v1838, %v1856
    %v1858 = vpop.f32.mrf.mxu0
    %v1859 = vadd.f32 %v1840, %v1858
    %1860 = vdwg.mxu0
    %1861 = vmatpush.bf16.msra.mxu0 %v1771
    %1862 = vmatpush.bf16.msra.mxu0 %v1770
    %1863 = vmatpush.bf16.msra.mxu0 %v1769
    %1864 = vmatpush.bf16.msra.mxu0 %v1768
    %1865 = vmatpush.bf16.msra.mxu0 %v1767
    %1866 = vmatpush.bf16.msra.mxu0 %v1766
    %1867 = vmatpush.bf16.msra.mxu0 %v1765
    %1868 = vmatpush.bf16.msra.mxu0 %v1764
    %1869 = vmatmul.bf16.gmra.mxu0 %v1542
    %v1870 = vpop.f32.mrf.mxu0
    %v1871 = vadd.f32 %v1852, %v1870
    %v1872 = vpop.f32.mrf.mxu0
    %v1873 = vadd.f32 %v1854, %v1872
    %1874 = vmatmul.bf16.gmra.mxu0 %v1546
    %v1875 = vpop.f32.mrf.mxu0
    %v1876 = vadd.f32 %v1857, %v1875
    %v1877 = vpop.f32.mrf.mxu0
    %v1878 = vadd.f32 %v1859, %v1877
    %1879 = vdwg.mxu0
    %v1880 = vadd.f32 %v1149, %v1871
    %v1881 = vadd.f32 %v1150, %v1873
    %v1882 = vadd.f32 %v1151, %v1876
    %v1883 = vadd.f32 %v1152, %v1878
    %1884 = vst [vmem:[#allocation14] sm:$0xff] %v1880
    %1885 = vst [vmem:[#allocation14 + $0x8] sm:$0xff] %v1881
    %1886 = vst [vmem:[#allocation14 + $0x10] sm:$0xff] %v1882
    %1887 = vst [vmem:[#allocation14 + $0x18] sm:$0xff] %v1883
    // Predicated region
    $region58: #{tpu_custom_call.1} parent=1 // pred_check
      _
    $region59: #{tpu_custom_call.1} parent=1 // pred_check_branch
      %1889 = sbr.rel (0) target = $region61
    $region60: #{tpu_custom_call.1} parent=1 // pred_region
      %1891 = vsyncadd [#allocation4], 0
      %s1892 = sshll.u32 [#allocation14], 4
      %s1893 = int_to_ptr.vmem [resolvable:$true] %s1892
      %s1894 = sshll.u32 %s7, 4
      %s1895 = int_to_ptr.hbm [resolvable:$true] %s1894
      %1900 = dma.vmem_to_hbm [thread:$0]  %s1893, 512, %s1895, [#allocation4], 128, 128, 8
    $region61: #{tpu_custom_call.1} parent=1 // pred_fallthru
      _
    // Predicated region
    $region62: #{tpu_custom_call.1} parent=1 // pred_check
      _
    $region63: #{tpu_custom_call.1} parent=1 // pred_check_branch
      %1902 = sbr.rel (0) target = $region65
    $region64: #{tpu_custom_call.1} parent=1 // pred_region
      %1904 = dma.done [#allocation4], 512
    $region65: #{tpu_custom_call.1} parent=1 // pred_fallthru
      _
    %1905 = vsyncpa [#allocation3], 1
    %1906 = vsyncpa [#allocation6], 1
    %1907 = vsyncpa [#allocation9], 1
    %1908 = vsyncpa [#allocation12], 1
    %1909 = vsyncpa [#allocation4], 1

</llo_original>
